<compile_context>
chip_gen: v7x
topology: tpu7x:2x2x1
jax: 0.10.0
libtpu: 0.0.40
codegen_flags: <defaults>
</compile_context>

<pallas_src>
import functools

import numpy as np
import jax
import jax.numpy as jnp
from jax import lax
from jax.experimental import pallas as pl
from jax.experimental.pallas import tpu as pltpu


# ----------------------------------------------------------------------------
# One LR_PAD -> 3x3 conv (height dilation d, width circular) -> folded-BN bias -> ReLU
# layer on a channels-first fused-spatial activation a: (cin, H*W).
# ----------------------------------------------------------------------------
def _conv_layer_atrous(a, w_ref, b_ref, d, W, j, is_w0, is_wend):
    cin, m = a.shape
    dW = d * W

    # Circular width taps (kw = 0 / 2): lane roll by +-1 with a wrap-fix at the W boundary.
    left = jnp.where(is_w0, pltpu.roll(a, m - W + 1, axis=1), pltpu.roll(a, 1, axis=1))
    right = jnp.where(is_wend, pltpu.roll(a, W - 1, axis=1), pltpu.roll(a, m - 1, axis=1))

    # Height taps (kh = 0 / 2): whole-row lane roll by +-d*W, zero at the image boundary.
    top = j < dW                 # rows r < d      -> zero (kh = 0)
    bot = j >= m - dW            # rows r >= H - d -> zero (kh = 2)

    def up(t):                   # tap at row r - d
        return jnp.where(top, 0.0, pltpu.roll(t, dW, axis=1))

    def down(t):                 # tap at row r + d
        return jnp.where(bot, 0.0, pltpu.roll(t, m - dW, axis=1))

    # im2col, channels-first: rows ordered (kh, kw, cin) to match HWIO weight flattening.
    xs = jnp.concatenate(
        [up(left), up(a), up(right), left, a, right, down(left), down(a), down(right)],
        axis=0)                                                     # (9*cin, H*W)

    y = jnp.dot(w_ref[...], xs.astype(w_ref.dtype),
                preferred_element_type=jnp.float32)                 # (cout, H*W), f32 acc
    return jnp.maximum(y + b_ref[...], 0.0)                         # folded BN bias + ReLU


# ----------------------------------------------------------------------------
# Fused kernel: 4 a-trous conv layers + (row-select + circular pad + bilinear) resize,
# all in VMEM/vregs.  Output block is (nb, Cf, Hf*out_w): lane-dense, (c, h)-ordered.
# ----------------------------------------------------------------------------
def _fused_kernel(x_ref, w1, b1, w2, b2, w3, b3, w4, b4, B_ref, o_ref, *, W):
    nb, _, m = x_ref.shape
    j = lax.broadcasted_iota(jnp.int32, (1, m), 1)                  # fused spatial index
    is_w0 = (j % W) == 0
    is_wend = (j % W) == (W - 1)

    for i in range(nb):                                             # images in this block
        a = x_ref[i]                                                # (Cin, H*W)
        for (w_ref, b_ref), d in zip(((w1, b1), (w2, b2), (w3, b3), (w4, b4)),
                                     (1, 2, 4, 8)):
            a = _conv_layer_atrous(a, w_ref, b_ref, d, W, j, is_w0, is_wend)
        # Resize: row selection + circular pad + bilinear weights folded into B.
        o_ref[i] = jnp.dot(a, B_ref[...], preferred_element_type=jnp.float32)


# ----------------------------------------------------------------------------
# Width bilinear upsample weights (align_corners=False) for the padded width, as a matrix.
# ----------------------------------------------------------------------------
def _build_interp_matrix(Wp, out_w, factor):
    # Weights for kept output columns [factor : out_w+factor) of an upsample from Wp
    # columns to factor*Wp columns (matches F.interpolate align_corners=False).
    dst = np.arange(out_w, dtype=np.float64) + factor
    src = (dst + 0.5) / factor - 0.5
    src = np.maximum(src, 0.0)
    i0 = np.floor(src).astype(np.int64)
    frac = src - i0
    i0c = np.clip(i0, 0, Wp - 1)
    i1c = np.clip(i0 + 1, 0, Wp - 1)
    M = np.zeros((Wp, out_w), np.float32)
    cols = np.arange(out_w)
    M[i0c, cols] += (1.0 - frac).astype(np.float32)
    M[i1c, cols] += frac.astype(np.float32)
    return M


# ----------------------------------------------------------------------------
# Full forward pass (PyTorch NCHW in / NCHW out), one Pallas launch.
# ----------------------------------------------------------------------------
def global_height_conv_forward(x_nchw, params, out_w, *, mxu_dtype=jnp.float32):
    N, Cin, H, W = x_nchw.shape
    # TODO(synk): odd intermediate heights (H not divisible by 16) are not handled.
    assert H % 16 == 0, "fused kernel requires 4 stride-2 stages with even heights"
    assert out_w % W == 0
    factor = out_w // W
    Hf = H // 16
    Cf = params[-1][0].shape[-1]
    m = H * W

    # NCHW is already channels-first; collapsing (H, W) is a free metadata reshape.
    x2 = x_nchw.reshape(N, Cin, m)

    # BN-folded weights, channels-first: (cout, 9*cin), columns in (kh, kw, cin) order.
    ws = [jnp.transpose(w.reshape(9 * w.shape[2], w.shape[3])).astype(mxu_dtype)
          for w, _ in params]
    bs = [b.reshape(-1, 1) for _, b in params]                      # (cout, 1)

    # Interp matrix with the circular width pad folded in ...
    M = _build_interp_matrix(W + 2, out_w, factor)                  # (W+2, out_w) numpy
    Mp = M[1:W + 1].copy()
    Mp[W - 1] += M[0]
    Mp[0] += M[W + 1]                                               # (W, out_w)
    # ... and the stride-16 final-row selection folded in too: (H*W, Hf*out_w).
    B_np = np.zeros((m, Hf * out_w), np.float32)
    for hh in range(Hf):
        B_np[hh * 16 * W: hh * 16 * W + W, hh * out_w:(hh + 1) * out_w] = Mp
    B = jnp.asarray(B_np)

    # Grid: 2 fat blocks when possible (both v7x TCs busy; 1 extra cheap step on v5e/v6e).
    gn = 2 if (N % 2 == 0 and N >= 2) else 1
    nb = N // gn

    flops = 2 * N * m * sum(w.shape[0] * w.shape[1] for w in ws) + 2 * N * Cf * m * Hf * out_w
    bytes_accessed = 4 * (N * Cin * m + sum(int(np.prod(w.shape)) for w in ws)
                          + sum(int(np.prod(b.shape)) for b in bs)
                          + int(B_np.size) + N * Cf * Hf * out_w)

    full2 = lambda n: (0, 0)
    out = pl.pallas_call(
        functools.partial(_fused_kernel, W=W),
        out_shape=jax.ShapeDtypeStruct((N, Cf, Hf * out_w), jnp.float32),
        grid=(gn,),
        in_specs=[
            pl.BlockSpec((nb, Cin, m), lambda n: (n, 0, 0)),
            pl.BlockSpec(ws[0].shape, full2), pl.BlockSpec(bs[0].shape, full2),
            pl.BlockSpec(ws[1].shape, full2), pl.BlockSpec(bs[1].shape, full2),
            pl.BlockSpec(ws[2].shape, full2), pl.BlockSpec(bs[2].shape, full2),
            pl.BlockSpec(ws[3].shape, full2), pl.BlockSpec(bs[3].shape, full2),
            pl.BlockSpec(B.shape, full2),
        ],
        out_specs=pl.BlockSpec((nb, Cf, Hf * out_w), lambda n: (n, 0, 0)),
        compiler_params=pltpu.CompilerParams(dimension_semantics=("parallel",)),
        cost_estimate=pl.CostEstimate(flops=int(flops), transcendentals=0,
                                      bytes_accessed=int(bytes_accessed)),
    )(x2, ws[0], bs[0], ws[1], bs[1], ws[2], bs[2], ws[3], bs[3], B)

    # (N, Cf, Hf*out_w) is already (c, h)-ordered: pure reshape back to NCHW, no transpose.
    return out.reshape(N, Cf, Hf, out_w)


# ----------------------------------------------------------------------------
# Deterministic parameters (Conv2d weights/bias + eval-mode BN folded in).
# ----------------------------------------------------------------------------
def make_params(key, in_c, out_c, eps=1e-5):
    chans = [in_c, in_c // 2, in_c // 2, in_c // 4, out_c]
    params = []
    for i in range(4):
        cin, cout = chans[i], chans[i + 1]
        key, k1, k2, k3, k4, k5, k6 = jax.random.split(key, 7)
        w = 0.1 * jax.random.normal(k1, (3, 3, cin, cout), jnp.float32)      # HWIO
        b = 0.1 * jax.random.normal(k2, (cout,), jnp.float32)
        gamma = 1.0 + 0.1 * jax.random.normal(k3, (cout,), jnp.float32)
        beta = 0.1 * jax.random.normal(k4, (cout,), jnp.float32)
        mean = 0.1 * jax.random.normal(k5, (cout,), jnp.float32)
        var = 1.0 + 0.1 * jnp.abs(jax.random.normal(k6, (cout,), jnp.float32))
        scale = gamma * jax.lax.rsqrt(var + eps)
        w_f = w * scale.reshape(1, 1, 1, cout)
        b_f = (b - mean) * scale + beta
        params.append((w_f, b_f.reshape(1, cout)))
    return params


# ----------------------------------------------------------------------------
# Pure-JAX reference (for verification).
# ----------------------------------------------------------------------------
def _reference_forward(x_nchw, params, out_w):
    x = jnp.transpose(x_nchw, (0, 2, 3, 1))
    for w, b in params:
        xp = jnp.concatenate([x[:, :, -1:, :], x, x[:, :, :1, :]], axis=2)
        y = jax.lax.conv_general_dilated(
            xp, w, window_strides=(2, 1), padding=((1, 1), (0, 0)),
            dimension_numbers=("NHWC", "HWIO", "NHWC"))
        x = jax.nn.relu(y + b.reshape(1, 1, 1, -1))
    x = jnp.transpose(x, (0, 3, 1, 2))
    N, C, Hf, W = x.shape
    factor = out_w // W
    xp = jnp.concatenate([x[..., -1:], x, x[..., :1]], axis=3)
    M = jnp.asarray(_build_interp_matrix(W + 2, out_w, factor))
    return jnp.einsum("nchw,wo->ncho", xp, M)


if __name__ == "__main__":
    key = jax.random.PRNGKey(0)
    kx, kp = jax.random.split(key)

    N, in_c, H, W = 2, 16, 32, 16
    out_c = 8
    out_w = 64                       # out_w % W == 0; factor = 4

    x = jax.random.normal(kx, (N, in_c, H, W), jnp.float32)   # PyTorch NCHW input
    params = make_params(kp, in_c, out_c)

    fwd = jax.jit(functools.partial(global_height_conv_forward, out_w=out_w))
    y = jax.block_until_ready(fwd(x, params))

    y_ref = jax.block_until_ready(_reference_forward(x, params, out_w))
    assert y.shape == (N, out_c, H // 16, out_w), y.shape
    np.testing.assert_allclose(np.asarray(y), np.asarray(y_ref), rtol=2e-4, atol=2e-4)

    print("KERNEL_OK")
</pallas_src>

<mosaic_0001>
module attributes {stable_mosaic.version = 11 : i64} {
  func.func @_fused_kernel(%arg0: i32, %arg1: memref<1x16x512xf32, #tpu.memory_space<vmem>>, %arg2: memref<8x144xf32, #tpu.memory_space<vmem>>, %arg3: memref<8x1xf32, #tpu.memory_space<vmem>>, %arg4: memref<8x72xf32, #tpu.memory_space<vmem>>, %arg5: memref<8x1xf32, #tpu.memory_space<vmem>>, %arg6: memref<4x72xf32, #tpu.memory_space<vmem>>, %arg7: memref<4x1xf32, #tpu.memory_space<vmem>>, %arg8: memref<8x36xf32, #tpu.memory_space<vmem>>, %arg9: memref<8x1xf32, #tpu.memory_space<vmem>>, %arg10: memref<512x128xf32, #tpu.memory_space<vmem>>, %arg11: memref<1x8x128xf32, #tpu.memory_space<vmem>>) attributes {dimension_semantics = [#tpu.dimension_semantics<parallel>], iteration_bounds = array<i64: 2>, scalar_prefetch = 0 : i64, scratch_operands = 0 : i64, tpu.core_type = #tpu.core_type<tc>, window_params = [{transform_indices = @transform_0, window_bounds = array<i64: 1, 16, 512>}, {pipeline_mode = #tpu.pipeline_mode<synchronous>, transform_indices = @transform_1, window_bounds = array<i64: 8, 144>}, {pipeline_mode = #tpu.pipeline_mode<synchronous>, transform_indices = @transform_2, window_bounds = array<i64: 8, 1>}, {pipeline_mode = #tpu.pipeline_mode<synchronous>, transform_indices = @transform_3, window_bounds = array<i64: 8, 72>}, {pipeline_mode = #tpu.pipeline_mode<synchronous>, transform_indices = @transform_4, window_bounds = array<i64: 8, 1>}, {pipeline_mode = #tpu.pipeline_mode<synchronous>, transform_indices = @transform_5, window_bounds = array<i64: 4, 72>}, {pipeline_mode = #tpu.pipeline_mode<synchronous>, transform_indices = @transform_6, window_bounds = array<i64: 4, 1>}, {pipeline_mode = #tpu.pipeline_mode<synchronous>, transform_indices = @transform_7, window_bounds = array<i64: 8, 36>}, {pipeline_mode = #tpu.pipeline_mode<synchronous>, transform_indices = @transform_8, window_bounds = array<i64: 8, 1>}, {pipeline_mode = #tpu.pipeline_mode<synchronous>, transform_indices = @transform_9, window_bounds = array<i64: 512, 128>}, {transform_indices = @transform_10, window_bounds = array<i64: 1, 8, 128>}]} {
    %0 = tpu.iota {dimensions = array<i32: 1>} : vector<1x512xi32>
    %c16_i32 = arith.constant 16 : i32
    %c0_i32 = arith.constant 0 : i32
    %1 = arith.cmpi eq, %c16_i32, %c0_i32 : i32
    %c1_i32 = arith.constant 1 : i32
    %2 = arith.select %1, %c1_i32, %c16_i32 : i32
    %3 = vector.broadcast %2 : i32 to vector<1x512xi32>
    %4 = arith.remsi %0, %3 : vector<1x512xi32>
    %c0_i32_0 = arith.constant 0 : i32
    %5 = vector.broadcast %c0_i32_0 : i32 to vector<1x512xi32>
    %6 = arith.cmpi ne, %4, %5 : vector<1x512xi32>
    %c0_i32_1 = arith.constant 0 : i32
    %7 = vector.broadcast %c0_i32_1 : i32 to vector<1x512xi32>
    %8 = arith.cmpi slt, %4, %7 : vector<1x512xi32>
    %c0_i32_2 = arith.constant 0 : i32
    %9 = arith.cmpi slt, %2, %c0_i32_2 : i32
    %10 = vector.broadcast %9 : i1 to vector<1x512xi1>
    %11 = vector.broadcast %10 : vector<1x512xi1> to vector<1x512xi1>
    %12 = arith.xori %8, %11 : vector<1x512xi1>
    %13 = arith.andi %12, %6 : vector<1x512xi1>
    %14 = vector.broadcast %2 : i32 to vector<1x512xi32>
    %15 = arith.addi %4, %14 : vector<1x512xi32>
    %16 = arith.select %13, %15, %4 : vector<1x512xi1>, vector<1x512xi32>
    %c0_i32_3 = arith.constant 0 : i32
    %17 = vector.broadcast %c0_i32_3 : i32 to vector<1x512xi32>
    %18 = arith.cmpi eq, %16, %17 : vector<1x512xi32>
    %c16_i32_4 = arith.constant 16 : i32
    %c0_i32_5 = arith.constant 0 : i32
    %19 = arith.cmpi eq, %c16_i32_4, %c0_i32_5 : i32
    %c1_i32_6 = arith.constant 1 : i32
    %20 = arith.select %19, %c1_i32_6, %c16_i32_4 : i32
    %21 = vector.broadcast %20 : i32 to vector<1x512xi32>
    %22 = arith.remsi %0, %21 : vector<1x512xi32>
    %c0_i32_7 = arith.constant 0 : i32
    %23 = vector.broadcast %c0_i32_7 : i32 to vector<1x512xi32>
    %24 = arith.cmpi ne, %22, %23 : vector<1x512xi32>
    %c0_i32_8 = arith.constant 0 : i32
    %25 = vector.broadcast %c0_i32_8 : i32 to vector<1x512xi32>
    %26 = arith.cmpi slt, %22, %25 : vector<1x512xi32>
    %c0_i32_9 = arith.constant 0 : i32
    %27 = arith.cmpi slt, %20, %c0_i32_9 : i32
    %28 = vector.broadcast %27 : i1 to vector<1x512xi1>
    %29 = vector.broadcast %28 : vector<1x512xi1> to vector<1x512xi1>
    %30 = arith.xori %26, %29 : vector<1x512xi1>
    %31 = arith.andi %30, %24 : vector<1x512xi1>
    %32 = vector.broadcast %20 : i32 to vector<1x512xi32>
    %33 = arith.addi %22, %32 : vector<1x512xi32>
    %34 = arith.select %31, %33, %22 : vector<1x512xi1>, vector<1x512xi32>
    %c15_i32 = arith.constant 15 : i32
    %35 = vector.broadcast %c15_i32 : i32 to vector<1x512xi32>
    %36 = arith.cmpi eq, %34, %35 : vector<1x512xi32>
    %c0 = arith.constant 0 : index
    %c0_10 = arith.constant 0 : index
    %c0_11 = arith.constant 0 : index
    %37 = vector.load %arg1[%c0, %c0_10, %c0_11] : memref<1x16x512xf32, #tpu.memory_space<vmem>>, vector<1x16x512xf32>
    %38 = vector.shape_cast %37 : vector<1x16x512xf32> to vector<16x512xf32>
    %c497_i32 = arith.constant 497 : i32
    %39 = tpu.dynamic_rotate %38 by %c497_i32 dim 1 : vector<16x512xf32>, i32 -> vector<16x512xf32>
    %c1_i32_12 = arith.constant 1 : i32
    %40 = tpu.dynamic_rotate %38 by %c1_i32_12 dim 1 : vector<16x512xf32>, i32 -> vector<16x512xf32>
    %41 = vector.shape_cast %18 : vector<1x512xi1> to vector<1x512xi1>
    %42 = vector.broadcast %41 : vector<1x512xi1> to vector<16x512xi1>
    %43 = arith.select %42, %39, %40 : vector<16x512xi1>, vector<16x512xf32>
    %c15_i32_13 = arith.constant 15 : i32
    %44 = tpu.dynamic_rotate %38 by %c15_i32_13 dim 1 : vector<16x512xf32>, i32 -> vector<16x512xf32>
    %c511_i32 = arith.constant 511 : i32
    %45 = tpu.dynamic_rotate %38 by %c511_i32 dim 1 : vector<16x512xf32>, i32 -> vector<16x512xf32>
    %46 = vector.shape_cast %36 : vector<1x512xi1> to vector<1x512xi1>
    %47 = vector.broadcast %46 : vector<1x512xi1> to vector<16x512xi1>
    %48 = arith.select %47, %44, %45 : vector<16x512xi1>, vector<16x512xf32>
    %c16_i32_14 = arith.constant 16 : i32
    %49 = vector.broadcast %c16_i32_14 : i32 to vector<1x512xi32>
    %50 = arith.cmpi slt, %0, %49 : vector<1x512xi32>
    %c496_i32 = arith.constant 496 : i32
    %51 = vector.broadcast %c496_i32 : i32 to vector<1x512xi32>
    %52 = arith.cmpi sge, %0, %51 : vector<1x512xi32>
    %c16_i32_15 = arith.constant 16 : i32
    %53 = tpu.dynamic_rotate %43 by %c16_i32_15 dim 1 : vector<16x512xf32>, i32 -> vector<16x512xf32>
    %cst = arith.constant 0.000000e+00 : f32
    %54 = vector.shape_cast %50 : vector<1x512xi1> to vector<1x512xi1>
    %55 = vector.broadcast %54 : vector<1x512xi1> to vector<16x512xi1>
    %56 = vector.broadcast %cst : f32 to vector<16x512xf32>
    %57 = arith.select %55, %56, %53 : vector<16x512xi1>, vector<16x512xf32>
    %c16_i32_16 = arith.constant 16 : i32
    %58 = tpu.dynamic_rotate %38 by %c16_i32_16 dim 1 : vector<16x512xf32>, i32 -> vector<16x512xf32>
    %cst_17 = arith.constant 0.000000e+00 : f32
    %59 = vector.shape_cast %50 : vector<1x512xi1> to vector<1x512xi1>
    %60 = vector.broadcast %59 : vector<1x512xi1> to vector<16x512xi1>
    %61 = vector.broadcast %cst_17 : f32 to vector<16x512xf32>
    %62 = arith.select %60, %61, %58 : vector<16x512xi1>, vector<16x512xf32>
    %c16_i32_18 = arith.constant 16 : i32
    %63 = tpu.dynamic_rotate %48 by %c16_i32_18 dim 1 : vector<16x512xf32>, i32 -> vector<16x512xf32>
    %cst_19 = arith.constant 0.000000e+00 : f32
    %64 = vector.shape_cast %50 : vector<1x512xi1> to vector<1x512xi1>
    %65 = vector.broadcast %64 : vector<1x512xi1> to vector<16x512xi1>
    %66 = vector.broadcast %cst_19 : f32 to vector<16x512xf32>
    %67 = arith.select %65, %66, %63 : vector<16x512xi1>, vector<16x512xf32>
    %c496_i32_20 = arith.constant 496 : i32
    %68 = tpu.dynamic_rotate %43 by %c496_i32_20 dim 1 : vector<16x512xf32>, i32 -> vector<16x512xf32>
    %cst_21 = arith.constant 0.000000e+00 : f32
    %69 = vector.shape_cast %52 : vector<1x512xi1> to vector<1x512xi1>
    %70 = vector.broadcast %69 : vector<1x512xi1> to vector<16x512xi1>
    %71 = vector.broadcast %cst_21 : f32 to vector<16x512xf32>
    %72 = arith.select %70, %71, %68 : vector<16x512xi1>, vector<16x512xf32>
    %c496_i32_22 = arith.constant 496 : i32
    %73 = tpu.dynamic_rotate %38 by %c496_i32_22 dim 1 : vector<16x512xf32>, i32 -> vector<16x512xf32>
    %cst_23 = arith.constant 0.000000e+00 : f32
    %74 = vector.shape_cast %52 : vector<1x512xi1> to vector<1x512xi1>
    %75 = vector.broadcast %74 : vector<1x512xi1> to vector<16x512xi1>
    %76 = vector.broadcast %cst_23 : f32 to vector<16x512xf32>
    %77 = arith.select %75, %76, %73 : vector<16x512xi1>, vector<16x512xf32>
    %c496_i32_24 = arith.constant 496 : i32
    %78 = tpu.dynamic_rotate %48 by %c496_i32_24 dim 1 : vector<16x512xf32>, i32 -> vector<16x512xf32>
    %cst_25 = arith.constant 0.000000e+00 : f32
    %79 = vector.shape_cast %52 : vector<1x512xi1> to vector<1x512xi1>
    %80 = vector.broadcast %79 : vector<1x512xi1> to vector<16x512xi1>
    %81 = vector.broadcast %cst_25 : f32 to vector<16x512xf32>
    %82 = arith.select %80, %81, %78 : vector<16x512xi1>, vector<16x512xf32>
    %83 = tpu.concatenate %57, %62, %67, %43, %38, %48, %72, %77, %82 in 0 : vector<16x512xf32>, vector<16x512xf32>, vector<16x512xf32>, vector<16x512xf32>, vector<16x512xf32>, vector<16x512xf32>, vector<16x512xf32>, vector<16x512xf32>, vector<16x512xf32> -> vector<144x512xf32>
    %c0_26 = arith.constant 0 : index
    %c0_27 = arith.constant 0 : index
    %84 = vector.load %arg2[%c0_26, %c0_27] : memref<8x144xf32, #tpu.memory_space<vmem>>, vector<8x144xf32>
    %cst_28 = arith.constant dense<0.000000e+00> : vector<8x512xf32>
    %85 = tpu.matmul %84, %83, %cst_28 {dimension_numbers = #tpu.dot_dimension_numbers<[1], [0], [0], [1], [0, 0, 1, 1], [], []>} : vector<8x144xf32>, vector<144x512xf32>, vector<8x512xf32> -> vector<8x512xf32>
    %c0_29 = arith.constant 0 : index
    %c0_30 = arith.constant 0 : index
    %86 = vector.load %arg3[%c0_29, %c0_30] : memref<8x1xf32, #tpu.memory_space<vmem>>, vector<8x1xf32>
    %87 = vector.broadcast %86 : vector<8x1xf32> to vector<8x512xf32>
    %88 = arith.addf %85, %87 : vector<8x512xf32>
    %cst_31 = arith.constant 0.000000e+00 : f32
    %89 = vector.broadcast %cst_31 : f32 to vector<8x512xf32>
    %90 = arith.maximumf %88, %89 : vector<8x512xf32>
    %c497_i32_32 = arith.constant 497 : i32
    %91 = tpu.dynamic_rotate %90 by %c497_i32_32 dim 1 : vector<8x512xf32>, i32 -> vector<8x512xf32>
    %c1_i32_33 = arith.constant 1 : i32
    %92 = tpu.dynamic_rotate %90 by %c1_i32_33 dim 1 : vector<8x512xf32>, i32 -> vector<8x512xf32>
    %93 = vector.shape_cast %18 : vector<1x512xi1> to vector<1x512xi1>
    %94 = vector.broadcast %93 : vector<1x512xi1> to vector<8x512xi1>
    %95 = arith.select %94, %91, %92 : vector<8x512xi1>, vector<8x512xf32>
    %c15_i32_34 = arith.constant 15 : i32
    %96 = tpu.dynamic_rotate %90 by %c15_i32_34 dim 1 : vector<8x512xf32>, i32 -> vector<8x512xf32>
    %c511_i32_35 = arith.constant 511 : i32
    %97 = tpu.dynamic_rotate %90 by %c511_i32_35 dim 1 : vector<8x512xf32>, i32 -> vector<8x512xf32>
    %98 = vector.shape_cast %36 : vector<1x512xi1> to vector<1x512xi1>
    %99 = vector.broadcast %98 : vector<1x512xi1> to vector<8x512xi1>
    %100 = arith.select %99, %96, %97 : vector<8x512xi1>, vector<8x512xf32>
    %c32_i32 = arith.constant 32 : i32
    %101 = vector.broadcast %c32_i32 : i32 to vector<1x512xi32>
    %102 = arith.cmpi slt, %0, %101 : vector<1x512xi32>
    %c480_i32 = arith.constant 480 : i32
    %103 = vector.broadcast %c480_i32 : i32 to vector<1x512xi32>
    %104 = arith.cmpi sge, %0, %103 : vector<1x512xi32>
    %c32_i32_36 = arith.constant 32 : i32
    %105 = tpu.dynamic_rotate %95 by %c32_i32_36 dim 1 : vector<8x512xf32>, i32 -> vector<8x512xf32>
    %cst_37 = arith.constant 0.000000e+00 : f32
    %106 = vector.shape_cast %102 : vector<1x512xi1> to vector<1x512xi1>
    %107 = vector.broadcast %106 : vector<1x512xi1> to vector<8x512xi1>
    %108 = vector.broadcast %cst_37 : f32 to vector<8x512xf32>
    %109 = arith.select %107, %108, %105 : vector<8x512xi1>, vector<8x512xf32>
    %c32_i32_38 = arith.constant 32 : i32
    %110 = tpu.dynamic_rotate %90 by %c32_i32_38 dim 1 : vector<8x512xf32>, i32 -> vector<8x512xf32>
    %cst_39 = arith.constant 0.000000e+00 : f32
    %111 = vector.shape_cast %102 : vector<1x512xi1> to vector<1x512xi1>
    %112 = vector.broadcast %111 : vector<1x512xi1> to vector<8x512xi1>
    %113 = vector.broadcast %cst_39 : f32 to vector<8x512xf32>
    %114 = arith.select %112, %113, %110 : vector<8x512xi1>, vector<8x512xf32>
    %c32_i32_40 = arith.constant 32 : i32
    %115 = tpu.dynamic_rotate %100 by %c32_i32_40 dim 1 : vector<8x512xf32>, i32 -> vector<8x512xf32>
    %cst_41 = arith.constant 0.000000e+00 : f32
    %116 = vector.shape_cast %102 : vector<1x512xi1> to vector<1x512xi1>
    %117 = vector.broadcast %116 : vector<1x512xi1> to vector<8x512xi1>
    %118 = vector.broadcast %cst_41 : f32 to vector<8x512xf32>
    %119 = arith.select %117, %118, %115 : vector<8x512xi1>, vector<8x512xf32>
    %c480_i32_42 = arith.constant 480 : i32
    %120 = tpu.dynamic_rotate %95 by %c480_i32_42 dim 1 : vector<8x512xf32>, i32 -> vector<8x512xf32>
    %cst_43 = arith.constant 0.000000e+00 : f32
    %121 = vector.shape_cast %104 : vector<1x512xi1> to vector<1x512xi1>
    %122 = vector.broadcast %121 : vector<1x512xi1> to vector<8x512xi1>
    %123 = vector.broadcast %cst_43 : f32 to vector<8x512xf32>
    %124 = arith.select %122, %123, %120 : vector<8x512xi1>, vector<8x512xf32>
    %c480_i32_44 = arith.constant 480 : i32
    %125 = tpu.dynamic_rotate %90 by %c480_i32_44 dim 1 : vector<8x512xf32>, i32 -> vector<8x512xf32>
    %cst_45 = arith.constant 0.000000e+00 : f32
    %126 = vector.shape_cast %104 : vector<1x512xi1> to vector<1x512xi1>
    %127 = vector.broadcast %126 : vector<1x512xi1> to vector<8x512xi1>
    %128 = vector.broadcast %cst_45 : f32 to vector<8x512xf32>
    %129 = arith.select %127, %128, %125 : vector<8x512xi1>, vector<8x512xf32>
    %c480_i32_46 = arith.constant 480 : i32
    %130 = tpu.dynamic_rotate %100 by %c480_i32_46 dim 1 : vector<8x512xf32>, i32 -> vector<8x512xf32>
    %cst_47 = arith.constant 0.000000e+00 : f32
    %131 = vector.shape_cast %104 : vector<1x512xi1> to vector<1x512xi1>
    %132 = vector.broadcast %131 : vector<1x512xi1> to vector<8x512xi1>
    %133 = vector.broadcast %cst_47 : f32 to vector<8x512xf32>
    %134 = arith.select %132, %133, %130 : vector<8x512xi1>, vector<8x512xf32>
    %135 = tpu.concatenate %109, %114, %119, %95, %90, %100, %124, %129, %134 in 0 : vector<8x512xf32>, vector<8x512xf32>, vector<8x512xf32>, vector<8x512xf32>, vector<8x512xf32>, vector<8x512xf32>, vector<8x512xf32>, vector<8x512xf32>, vector<8x512xf32> -> vector<72x512xf32>
    %c0_48 = arith.constant 0 : index
    %c0_49 = arith.constant 0 : index
    %136 = vector.load %arg4[%c0_48, %c0_49] : memref<8x72xf32, #tpu.memory_space<vmem>>, vector<8x72xf32>
    %cst_50 = arith.constant dense<0.000000e+00> : vector<8x512xf32>
    %137 = tpu.matmul %136, %135, %cst_50 {dimension_numbers = #tpu.dot_dimension_numbers<[1], [0], [0], [1], [0, 0, 1, 1], [], []>} : vector<8x72xf32>, vector<72x512xf32>, vector<8x512xf32> -> vector<8x512xf32>
    %c0_51 = arith.constant 0 : index
    %c0_52 = arith.constant 0 : index
    %138 = vector.load %arg5[%c0_51, %c0_52] : memref<8x1xf32, #tpu.memory_space<vmem>>, vector<8x1xf32>
    %139 = vector.broadcast %138 : vector<8x1xf32> to vector<8x512xf32>
    %140 = arith.addf %137, %139 : vector<8x512xf32>
    %cst_53 = arith.constant 0.000000e+00 : f32
    %141 = vector.broadcast %cst_53 : f32 to vector<8x512xf32>
    %142 = arith.maximumf %140, %141 : vector<8x512xf32>
    %c497_i32_54 = arith.constant 497 : i32
    %143 = tpu.dynamic_rotate %142 by %c497_i32_54 dim 1 : vector<8x512xf32>, i32 -> vector<8x512xf32>
    %c1_i32_55 = arith.constant 1 : i32
    %144 = tpu.dynamic_rotate %142 by %c1_i32_55 dim 1 : vector<8x512xf32>, i32 -> vector<8x512xf32>
    %145 = vector.shape_cast %18 : vector<1x512xi1> to vector<1x512xi1>
    %146 = vector.broadcast %145 : vector<1x512xi1> to vector<8x512xi1>
    %147 = arith.select %146, %143, %144 : vector<8x512xi1>, vector<8x512xf32>
    %c15_i32_56 = arith.constant 15 : i32
    %148 = tpu.dynamic_rotate %142 by %c15_i32_56 dim 1 : vector<8x512xf32>, i32 -> vector<8x512xf32>
    %c511_i32_57 = arith.constant 511 : i32
    %149 = tpu.dynamic_rotate %142 by %c511_i32_57 dim 1 : vector<8x512xf32>, i32 -> vector<8x512xf32>
    %150 = vector.shape_cast %36 : vector<1x512xi1> to vector<1x512xi1>
    %151 = vector.broadcast %150 : vector<1x512xi1> to vector<8x512xi1>
    %152 = arith.select %151, %148, %149 : vector<8x512xi1>, vector<8x512xf32>
    %c64_i32 = arith.constant 64 : i32
    %153 = vector.broadcast %c64_i32 : i32 to vector<1x512xi32>
    %154 = arith.cmpi slt, %0, %153 : vector<1x512xi32>
    %c448_i32 = arith.constant 448 : i32
    %155 = vector.broadcast %c448_i32 : i32 to vector<1x512xi32>
    %156 = arith.cmpi sge, %0, %155 : vector<1x512xi32>
    %c64_i32_58 = arith.constant 64 : i32
    %157 = tpu.dynamic_rotate %147 by %c64_i32_58 dim 1 : vector<8x512xf32>, i32 -> vector<8x512xf32>
    %cst_59 = arith.constant 0.000000e+00 : f32
    %158 = vector.shape_cast %154 : vector<1x512xi1> to vector<1x512xi1>
    %159 = vector.broadcast %158 : vector<1x512xi1> to vector<8x512xi1>
    %160 = vector.broadcast %cst_59 : f32 to vector<8x512xf32>
    %161 = arith.select %159, %160, %157 : vector<8x512xi1>, vector<8x512xf32>
    %c64_i32_60 = arith.constant 64 : i32
    %162 = tpu.dynamic_rotate %142 by %c64_i32_60 dim 1 : vector<8x512xf32>, i32 -> vector<8x512xf32>
    %cst_61 = arith.constant 0.000000e+00 : f32
    %163 = vector.shape_cast %154 : vector<1x512xi1> to vector<1x512xi1>
    %164 = vector.broadcast %163 : vector<1x512xi1> to vector<8x512xi1>
    %165 = vector.broadcast %cst_61 : f32 to vector<8x512xf32>
    %166 = arith.select %164, %165, %162 : vector<8x512xi1>, vector<8x512xf32>
    %c64_i32_62 = arith.constant 64 : i32
    %167 = tpu.dynamic_rotate %152 by %c64_i32_62 dim 1 : vector<8x512xf32>, i32 -> vector<8x512xf32>
    %cst_63 = arith.constant 0.000000e+00 : f32
    %168 = vector.shape_cast %154 : vector<1x512xi1> to vector<1x512xi1>
    %169 = vector.broadcast %168 : vector<1x512xi1> to vector<8x512xi1>
    %170 = vector.broadcast %cst_63 : f32 to vector<8x512xf32>
    %171 = arith.select %169, %170, %167 : vector<8x512xi1>, vector<8x512xf32>
    %c448_i32_64 = arith.constant 448 : i32
    %172 = tpu.dynamic_rotate %147 by %c448_i32_64 dim 1 : vector<8x512xf32>, i32 -> vector<8x512xf32>
    %cst_65 = arith.constant 0.000000e+00 : f32
    %173 = vector.shape_cast %156 : vector<1x512xi1> to vector<1x512xi1>
    %174 = vector.broadcast %173 : vector<1x512xi1> to vector<8x512xi1>
    %175 = vector.broadcast %cst_65 : f32 to vector<8x512xf32>
    %176 = arith.select %174, %175, %172 : vector<8x512xi1>, vector<8x512xf32>
    %c448_i32_66 = arith.constant 448 : i32
    %177 = tpu.dynamic_rotate %142 by %c448_i32_66 dim 1 : vector<8x512xf32>, i32 -> vector<8x512xf32>
    %cst_67 = arith.constant 0.000000e+00 : f32
    %178 = vector.shape_cast %156 : vector<1x512xi1> to vector<1x512xi1>
    %179 = vector.broadcast %178 : vector<1x512xi1> to vector<8x512xi1>
    %180 = vector.broadcast %cst_67 : f32 to vector<8x512xf32>
    %181 = arith.select %179, %180, %177 : vector<8x512xi1>, vector<8x512xf32>
    %c448_i32_68 = arith.constant 448 : i32
    %182 = tpu.dynamic_rotate %152 by %c448_i32_68 dim 1 : vector<8x512xf32>, i32 -> vector<8x512xf32>
    %cst_69 = arith.constant 0.000000e+00 : f32
    %183 = vector.shape_cast %156 : vector<1x512xi1> to vector<1x512xi1>
    %184 = vector.broadcast %183 : vector<1x512xi1> to vector<8x512xi1>
    %185 = vector.broadcast %cst_69 : f32 to vector<8x512xf32>
    %186 = arith.select %184, %185, %182 : vector<8x512xi1>, vector<8x512xf32>
    %187 = tpu.concatenate %161, %166, %171, %147, %142, %152, %176, %181, %186 in 0 : vector<8x512xf32>, vector<8x512xf32>, vector<8x512xf32>, vector<8x512xf32>, vector<8x512xf32>, vector<8x512xf32>, vector<8x512xf32>, vector<8x512xf32>, vector<8x512xf32> -> vector<72x512xf32>
    %c0_70 = arith.constant 0 : index
    %c0_71 = arith.constant 0 : index
    %188 = vector.load %arg6[%c0_70, %c0_71] : memref<4x72xf32, #tpu.memory_space<vmem>>, vector<4x72xf32>
    %cst_72 = arith.constant dense<0.000000e+00> : vector<4x512xf32>
    %189 = tpu.matmul %188, %187, %cst_72 {dimension_numbers = #tpu.dot_dimension_numbers<[1], [0], [0], [1], [0, 0, 1, 1], [], []>} : vector<4x72xf32>, vector<72x512xf32>, vector<4x512xf32> -> vector<4x512xf32>
    %c0_73 = arith.constant 0 : index
    %c0_74 = arith.constant 0 : index
    %190 = vector.load %arg7[%c0_73, %c0_74] : memref<4x1xf32, #tpu.memory_space<vmem>>, vector<4x1xf32>
    %191 = vector.broadcast %190 : vector<4x1xf32> to vector<4x512xf32>
    %192 = arith.addf %189, %191 : vector<4x512xf32>
    %cst_75 = arith.constant 0.000000e+00 : f32
    %193 = vector.broadcast %cst_75 : f32 to vector<4x512xf32>
    %194 = arith.maximumf %192, %193 : vector<4x512xf32>
    %c497_i32_76 = arith.constant 497 : i32
    %195 = tpu.dynamic_rotate %194 by %c497_i32_76 dim 1 : vector<4x512xf32>, i32 -> vector<4x512xf32>
    %c1_i32_77 = arith.constant 1 : i32
    %196 = tpu.dynamic_rotate %194 by %c1_i32_77 dim 1 : vector<4x512xf32>, i32 -> vector<4x512xf32>
    %197 = vector.shape_cast %18 : vector<1x512xi1> to vector<1x512xi1>
    %198 = vector.broadcast %197 : vector<1x512xi1> to vector<4x512xi1>
    %199 = arith.select %198, %195, %196 : vector<4x512xi1>, vector<4x512xf32>
    %c15_i32_78 = arith.constant 15 : i32
    %200 = tpu.dynamic_rotate %194 by %c15_i32_78 dim 1 : vector<4x512xf32>, i32 -> vector<4x512xf32>
    %c511_i32_79 = arith.constant 511 : i32
    %201 = tpu.dynamic_rotate %194 by %c511_i32_79 dim 1 : vector<4x512xf32>, i32 -> vector<4x512xf32>
    %202 = vector.shape_cast %36 : vector<1x512xi1> to vector<1x512xi1>
    %203 = vector.broadcast %202 : vector<1x512xi1> to vector<4x512xi1>
    %204 = arith.select %203, %200, %201 : vector<4x512xi1>, vector<4x512xf32>
    %c128_i32 = arith.constant 128 : i32
    %205 = vector.broadcast %c128_i32 : i32 to vector<1x512xi32>
    %206 = arith.cmpi slt, %0, %205 : vector<1x512xi32>
    %c384_i32 = arith.constant 384 : i32
    %207 = vector.broadcast %c384_i32 : i32 to vector<1x512xi32>
    %208 = arith.cmpi sge, %0, %207 : vector<1x512xi32>
    %c128_i32_80 = arith.constant 128 : i32
    %209 = tpu.dynamic_rotate %199 by %c128_i32_80 dim 1 : vector<4x512xf32>, i32 -> vector<4x512xf32>
    %cst_81 = arith.constant 0.000000e+00 : f32
    %210 = vector.shape_cast %206 : vector<1x512xi1> to vector<1x512xi1>
    %211 = vector.broadcast %210 : vector<1x512xi1> to vector<4x512xi1>
    %212 = vector.broadcast %cst_81 : f32 to vector<4x512xf32>
    %213 = arith.select %211, %212, %209 : vector<4x512xi1>, vector<4x512xf32>
    %c128_i32_82 = arith.constant 128 : i32
    %214 = tpu.dynamic_rotate %194 by %c128_i32_82 dim 1 : vector<4x512xf32>, i32 -> vector<4x512xf32>
    %cst_83 = arith.constant 0.000000e+00 : f32
    %215 = vector.shape_cast %206 : vector<1x512xi1> to vector<1x512xi1>
    %216 = vector.broadcast %215 : vector<1x512xi1> to vector<4x512xi1>
    %217 = vector.broadcast %cst_83 : f32 to vector<4x512xf32>
    %218 = arith.select %216, %217, %214 : vector<4x512xi1>, vector<4x512xf32>
    %c128_i32_84 = arith.constant 128 : i32
    %219 = tpu.dynamic_rotate %204 by %c128_i32_84 dim 1 : vector<4x512xf32>, i32 -> vector<4x512xf32>
    %cst_85 = arith.constant 0.000000e+00 : f32
    %220 = vector.shape_cast %206 : vector<1x512xi1> to vector<1x512xi1>
    %221 = vector.broadcast %220 : vector<1x512xi1> to vector<4x512xi1>
    %222 = vector.broadcast %cst_85 : f32 to vector<4x512xf32>
    %223 = arith.select %221, %222, %219 : vector<4x512xi1>, vector<4x512xf32>
    %c384_i32_86 = arith.constant 384 : i32
    %224 = tpu.dynamic_rotate %199 by %c384_i32_86 dim 1 : vector<4x512xf32>, i32 -> vector<4x512xf32>
    %cst_87 = arith.constant 0.000000e+00 : f32
    %225 = vector.shape_cast %208 : vector<1x512xi1> to vector<1x512xi1>
    %226 = vector.broadcast %225 : vector<1x512xi1> to vector<4x512xi1>
    %227 = vector.broadcast %cst_87 : f32 to vector<4x512xf32>
    %228 = arith.select %226, %227, %224 : vector<4x512xi1>, vector<4x512xf32>
    %c384_i32_88 = arith.constant 384 : i32
    %229 = tpu.dynamic_rotate %194 by %c384_i32_88 dim 1 : vector<4x512xf32>, i32 -> vector<4x512xf32>
    %cst_89 = arith.constant 0.000000e+00 : f32
    %230 = vector.shape_cast %208 : vector<1x512xi1> to vector<1x512xi1>
    %231 = vector.broadcast %230 : vector<1x512xi1> to vector<4x512xi1>
    %232 = vector.broadcast %cst_89 : f32 to vector<4x512xf32>
    %233 = arith.select %231, %232, %229 : vector<4x512xi1>, vector<4x512xf32>
    %c384_i32_90 = arith.constant 384 : i32
    %234 = tpu.dynamic_rotate %204 by %c384_i32_90 dim 1 : vector<4x512xf32>, i32 -> vector<4x512xf32>
    %cst_91 = arith.constant 0.000000e+00 : f32
    %235 = vector.shape_cast %208 : vector<1x512xi1> to vector<1x512xi1>
    %236 = vector.broadcast %235 : vector<1x512xi1> to vector<4x512xi1>
    %237 = vector.broadcast %cst_91 : f32 to vector<4x512xf32>
    %238 = arith.select %236, %237, %234 : vector<4x512xi1>, vector<4x512xf32>
    %239 = tpu.concatenate %213, %218, %223, %199, %194, %204, %228, %233, %238 in 0 : vector<4x512xf32>, vector<4x512xf32>, vector<4x512xf32>, vector<4x512xf32>, vector<4x512xf32>, vector<4x512xf32>, vector<4x512xf32>, vector<4x512xf32>, vector<4x512xf32> -> vector<36x512xf32>
    %c0_92 = arith.constant 0 : index
    %c0_93 = arith.constant 0 : index
    %240 = vector.load %arg8[%c0_92, %c0_93] : memref<8x36xf32, #tpu.memory_space<vmem>>, vector<8x36xf32>
    %cst_94 = arith.constant dense<0.000000e+00> : vector<8x512xf32>
    %241 = tpu.matmul %240, %239, %cst_94 {dimension_numbers = #tpu.dot_dimension_numbers<[1], [0], [0], [1], [0, 0, 1, 1], [], []>} : vector<8x36xf32>, vector<36x512xf32>, vector<8x512xf32> -> vector<8x512xf32>
    %c0_95 = arith.constant 0 : index
    %c0_96 = arith.constant 0 : index
    %242 = vector.load %arg9[%c0_95, %c0_96] : memref<8x1xf32, #tpu.memory_space<vmem>>, vector<8x1xf32>
    %243 = vector.broadcast %242 : vector<8x1xf32> to vector<8x512xf32>
    %244 = arith.addf %241, %243 : vector<8x512xf32>
    %cst_97 = arith.constant 0.000000e+00 : f32
    %245 = vector.broadcast %cst_97 : f32 to vector<8x512xf32>
    %246 = arith.maximumf %244, %245 : vector<8x512xf32>
    %c0_98 = arith.constant 0 : index
    %c0_99 = arith.constant 0 : index
    %247 = vector.load %arg10[%c0_98, %c0_99] : memref<512x128xf32, #tpu.memory_space<vmem>>, vector<512x128xf32>
    %cst_100 = arith.constant dense<0.000000e+00> : vector<8x128xf32>
    %248 = tpu.matmul %246, %247, %cst_100 {dimension_numbers = #tpu.dot_dimension_numbers<[1], [0], [0], [1], [0, 0, 1, 1], [], []>} : vector<8x512xf32>, vector<512x128xf32>, vector<8x128xf32> -> vector<8x128xf32>
    %c0_101 = arith.constant 0 : index
    %c0_102 = arith.constant 0 : index
    %c0_103 = arith.constant 0 : index
    %249 = vector.load %arg11[%c0_101, %c0_102, %c0_103] : memref<1x8x128xf32, #tpu.memory_space<vmem>>, vector<1x8x128xf32>
    %250 = vector.shape_cast %249 : vector<1x8x128xf32> to vector<8x128xf32>
    %251 = vector.shape_cast %248 : vector<8x128xf32> to vector<1x8x128xf32>
    tpu.vector_store %arg11[%c0_101, %c0_102, %c0_103], %251 {strides = array<i32>} : memref<1x8x128xf32, #tpu.memory_space<vmem>>, vector<1x8x128xf32>,
    return
  }
  func.func @transform_0(%arg0: i32) -> (i32, i32, i32) {
    %c0_i32 = arith.constant 0 : i32
    %c0_i32_0 = arith.constant 0 : i32
    %c0_i32_1 = arith.constant 0 : i32
    return %arg0, %c0_i32, %c0_i32_0 : i32, i32, i32
  }
  func.func @transform_1(%arg0: i32) -> (i32, i32) {
    %c0_i32 = arith.constant 0 : i32
    %c0_i32_0 = arith.constant 0 : i32
    %c0_i32_1 = arith.constant 0 : i32
    return %c0_i32, %c0_i32_0 : i32, i32
  }
  func.func @transform_2(%arg0: i32) -> (i32, i32) {
    %c0_i32 = arith.constant 0 : i32
    %c0_i32_0 = arith.constant 0 : i32
    %c0_i32_1 = arith.constant 0 : i32
    return %c0_i32, %c0_i32_0 : i32, i32
  }
  func.func @transform_3(%arg0: i32) -> (i32, i32) {
    %c0_i32 = arith.constant 0 : i32
    %c0_i32_0 = arith.constant 0 : i32
    %c0_i32_1 = arith.constant 0 : i32
    return %c0_i32, %c0_i32_0 : i32, i32
  }
  func.func @transform_4(%arg0: i32) -> (i32, i32) {
    %c0_i32 = arith.constant 0 : i32
    %c0_i32_0 = arith.constant 0 : i32
    %c0_i32_1 = arith.constant 0 : i32
    return %c0_i32, %c0_i32_0 : i32, i32
  }
  func.func @transform_5(%arg0: i32) -> (i32, i32) {
    %c0_i32 = arith.constant 0 : i32
    %c0_i32_0 = arith.constant 0 : i32
    %c0_i32_1 = arith.constant 0 : i32
    return %c0_i32, %c0_i32_0 : i32, i32
  }
  func.func @transform_6(%arg0: i32) -> (i32, i32) {
    %c0_i32 = arith.constant 0 : i32
    %c0_i32_0 = arith.constant 0 : i32
    %c0_i32_1 = arith.constant 0 : i32
    return %c0_i32, %c0_i32_0 : i32, i32
  }
  func.func @transform_7(%arg0: i32) -> (i32, i32) {
    %c0_i32 = arith.constant 0 : i32
    %c0_i32_0 = arith.constant 0 : i32
    %c0_i32_1 = arith.constant 0 : i32
    return %c0_i32, %c0_i32_0 : i32, i32
  }
  func.func @transform_8(%arg0: i32) -> (i32, i32) {
    %c0_i32 = arith.constant 0 : i32
    %c0_i32_0 = arith.constant 0 : i32
    %c0_i32_1 = arith.constant 0 : i32
    return %c0_i32, %c0_i32_0 : i32, i32
  }
  func.func @transform_9(%arg0: i32) -> (i32, i32) {
    %c0_i32 = arith.constant 0 : i32
    %c0_i32_0 = arith.constant 0 : i32
    %c0_i32_1 = arith.constant 0 : i32
    return %c0_i32, %c0_i32_0 : i32, i32
  }
  func.func @transform_10(%arg0: i32) -> (i32, i32, i32) {
    %c0_i32 = arith.constant 0 : i32
    %c0_i32_0 = arith.constant 0 : i32
    %c0_i32_1 = arith.constant 0 : i32
    return %arg0, %c0_i32, %c0_i32_0 : i32, i32, i32
  }
}

</mosaic_0001>

<llo_original>
// kernel: global_height_conv_forward.1
$region0: #{global_height_conv_forward.1}
  #allocation0 [shape = 'u32[]', space=smem, size = 0x4, offset = 0x4, fixed_abs, tag = 'smem constant byte address 0x4 - core index']
  #allocation1 [shape = 'u32[144,128]{1,0:T(1,128)}', space=vmem, size = 0x12000, scoped, tag = 'internal scratch']
  %s0 = inlined_call_operand.vmem [shape: f32[2,16,512], index: 0, kind: input, shape index: {}]
  %s1 = inlined_call_operand.vmem [shape: f32[8,144], index: 1, kind: input, shape index: {}]
  %s2 = inlined_call_operand.vmem [shape: f32[8,1], index: 2, kind: input, shape index: {}]
  %s3 = inlined_call_operand.vmem [shape: f32[8,72], index: 3, kind: input, shape index: {}]
  %s4 = inlined_call_operand.vmem [shape: f32[8,1], index: 4, kind: input, shape index: {}]
  %s5 = inlined_call_operand.vmem [shape: f32[4,72], index: 5, kind: input, shape index: {}]
  %s6 = inlined_call_operand.vmem [shape: f32[4,1], index: 6, kind: input, shape index: {}]
  %s7 = inlined_call_operand.vmem [shape: f32[8,36], index: 7, kind: input, shape index: {}]
  %s8 = inlined_call_operand.vmem [shape: f32[8,1], index: 8, kind: input, shape index: {}]
  %s9 = inlined_call_operand.vmem [shape: f32[512,128], index: 9, kind: input, shape index: {}]
  %s10 = inlined_call_operand.vmem [shape: f32[2,8,128], index: 10, kind: output, shape index: {}]
  %s11 = sld [smem:[#allocation0]]
  $region73: #{global_height_conv_forward.1} parent=0
    _
  %s13 = ssub.s32 1, %s11
  %s14 = scalar_select 0, %s13, %s11
  loop: start=0, step=1, limit=4
  $region2: #{global_height_conv_forward.1} parent=0 // loop_pre_header
    _
  $region3: #{global_height_conv_forward.1} parent=0 // loop_header
    %s16 = sphi 0, %s20
    %p17 = scmp.ge.s32.totalorder %s16, 4
    %s26 = sphi 0, %s28
    %s29 = sphi 0, %s26
    %s30 = sphi 0, %s29
    %s46 = sphi 0, %s30
    %s50 = sphi 0, %s50
    %s52 = sphi 0, %s50
    %s53 = sphi 0, %s52
    %s67 = sphi 0, %s53
    %s71 = sphi 0, %s71
    %s73 = sphi 0, %s71
    %s74 = sphi 0, %s73
    %s88 = sphi 0, %s74
    %s92 = sphi 0, %s92
    %s94 = sphi 0, %s92
    %s95 = sphi 0, %s94
    %s109 = sphi 0, %s95
    %s113 = sphi 0, %s113
    %s115 = sphi 0, %s113
    %s116 = sphi 0, %s115
    %s130 = sphi 0, %s116
    %s134 = sphi 0, %s134
    %s136 = sphi 0, %s134
    %s137 = sphi 0, %s136
    %s151 = sphi 0, %s137
    %s155 = sphi 0, %s155
    %s157 = sphi 0, %s155
    %s158 = sphi 0, %s157
    %s172 = sphi 0, %s158
    %s176 = sphi 0, %s176
    %s178 = sphi 0, %s176
    %s179 = sphi 0, %s178
    %s193 = sphi 0, %s179
    %s197 = sphi 0, %s197
    %s199 = sphi 0, %s197
    %s200 = sphi 0, %s199
    %s214 = sphi 0, %s200
    %s218 = sphi 0, %s218
    %s220 = sphi 0, %s218
    %s221 = sphi 0, %s220
    %s235 = sphi 0, %s221
    %s241 = sphi 0, %s243
    %s244 = sphi 0, %s241
    %s245 = sphi 0, %s244
    %s261 = sphi 0, %s245
  $region4: #{global_height_conv_forward.1} parent=0 // loop_header_branch
    %19 = sbr.rel (%p17) target = $region8
  $region5: #{global_height_conv_forward.1} parent=0 // loop_body
    %s21 = ssub.s32 %s16, 1
    %s22 = ssub.s32 %s16, 2
    %s23 = sadd.s32 %s16, 1
    %s24 = ssub.s32 %s16, %s23
    %p25 = scmp.eq.s32.totalorder %s24, 0
    %s27 = sadd.s32 %s26, 1
    %s28 = scalar_select %p25, %s26, %s27
    %p31 = pneg %p25
    %p32 = scmp.eq.s32.totalorder %s16, 1
    %p33 = por %p31, %p32
    %p34 = scmp.ne.s32.totalorder %s26, %s29
    %p35 = scmp.eq.s32.totalorder %s16, 0
    %p36 = por %p34, %p35
    %p37 = scmp.ne.s32.totalorder %s26, %s29
    %p38 = scmp.eq.s32.totalorder %s21, 1
    %p39 = por %p37, %p38
    %p40 = scmp.ne.s32.totalorder %s29, %s30
    %p41 = scmp.eq.s32.totalorder %s21, 0
    %p42 = por %p40, %p41
    %p43 = scmp.ne.s32.totalorder %s29, %s30
    %p44 = scmp.eq.s32.totalorder %s22, 1
    %p45 = por %p43, %p44
    %p47 = scmp.ne.s32.totalorder %s30, %s46
    %p48 = scmp.eq.s32.totalorder %s22, 0
    %p49 = por %p47, %p48
    %s51 = sadd.s32 %s50, 1
    %p54 = scmp.eq.s32.totalorder %s16, 1
    %p55 = scmp.ne.s32.totalorder %s50, %s52
    %p56 = scmp.eq.s32.totalorder %s16, 0
    %p57 = por %p55, %p56
    %p58 = scmp.ne.s32.totalorder %s50, %s52
    %p59 = scmp.eq.s32.totalorder %s21, 1
    %p60 = por %p58, %p59
    %p61 = scmp.ne.s32.totalorder %s52, %s53
    %p62 = scmp.eq.s32.totalorder %s21, 0
    %p63 = por %p61, %p62
    %p64 = scmp.ne.s32.totalorder %s52, %s53
    %p65 = scmp.eq.s32.totalorder %s22, 1
    %p66 = por %p64, %p65
    %p68 = scmp.ne.s32.totalorder %s53, %s67
    %p69 = scmp.eq.s32.totalorder %s22, 0
    %p70 = por %p68, %p69
    %s72 = sadd.s32 %s71, 1
    %p75 = scmp.eq.s32.totalorder %s16, 1
    %p76 = scmp.ne.s32.totalorder %s71, %s73
    %p77 = scmp.eq.s32.totalorder %s16, 0
    %p78 = por %p76, %p77
    %p79 = scmp.ne.s32.totalorder %s71, %s73
    %p80 = scmp.eq.s32.totalorder %s21, 1
    %p81 = por %p79, %p80
    %p82 = scmp.ne.s32.totalorder %s73, %s74
    %p83 = scmp.eq.s32.totalorder %s21, 0
    %p84 = por %p82, %p83
    %p85 = scmp.ne.s32.totalorder %s73, %s74
    %p86 = scmp.eq.s32.totalorder %s22, 1
    %p87 = por %p85, %p86
    %p89 = scmp.ne.s32.totalorder %s74, %s88
    %p90 = scmp.eq.s32.totalorder %s22, 0
    %p91 = por %p89, %p90
    %s93 = sadd.s32 %s92, 1
    %p96 = scmp.eq.s32.totalorder %s16, 1
    %p97 = scmp.ne.s32.totalorder %s92, %s94
    %p98 = scmp.eq.s32.totalorder %s16, 0
    %p99 = por %p97, %p98
    %p100 = scmp.ne.s32.totalorder %s92, %s94
    %p101 = scmp.eq.s32.totalorder %s21, 1
    %p102 = por %p100, %p101
    %p103 = scmp.ne.s32.totalorder %s94, %s95
    %p104 = scmp.eq.s32.totalorder %s21, 0
    %p105 = por %p103, %p104
    %p106 = scmp.ne.s32.totalorder %s94, %s95
    %p107 = scmp.eq.s32.totalorder %s22, 1
    %p108 = por %p106, %p107
    %p110 = scmp.ne.s32.totalorder %s95, %s109
    %p111 = scmp.eq.s32.totalorder %s22, 0
    %p112 = por %p110, %p111
    %s114 = sadd.s32 %s113, 1
    %p117 = scmp.eq.s32.totalorder %s16, 1
    %p118 = scmp.ne.s32.totalorder %s113, %s115
    %p119 = scmp.eq.s32.totalorder %s16, 0
    %p120 = por %p118, %p119
    %p121 = scmp.ne.s32.totalorder %s113, %s115
    %p122 = scmp.eq.s32.totalorder %s21, 1
    %p123 = por %p121, %p122
    %p124 = scmp.ne.s32.totalorder %s115, %s116
    %p125 = scmp.eq.s32.totalorder %s21, 0
    %p126 = por %p124, %p125
    %p127 = scmp.ne.s32.totalorder %s115, %s116
    %p128 = scmp.eq.s32.totalorder %s22, 1
    %p129 = por %p127, %p128
    %p131 = scmp.ne.s32.totalorder %s116, %s130
    %p132 = scmp.eq.s32.totalorder %s22, 0
    %p133 = por %p131, %p132
    %s135 = sadd.s32 %s134, 1
    %p138 = scmp.eq.s32.totalorder %s16, 1
    %p139 = scmp.ne.s32.totalorder %s134, %s136
    %p140 = scmp.eq.s32.totalorder %s16, 0
    %p141 = por %p139, %p140
    %p142 = scmp.ne.s32.totalorder %s134, %s136
    %p143 = scmp.eq.s32.totalorder %s21, 1
    %p144 = por %p142, %p143
    %p145 = scmp.ne.s32.totalorder %s136, %s137
    %p146 = scmp.eq.s32.totalorder %s21, 0
    %p147 = por %p145, %p146
    %p148 = scmp.ne.s32.totalorder %s136, %s137
    %p149 = scmp.eq.s32.totalorder %s22, 1
    %p150 = por %p148, %p149
    %p152 = scmp.ne.s32.totalorder %s137, %s151
    %p153 = scmp.eq.s32.totalorder %s22, 0
    %p154 = por %p152, %p153
    %s156 = sadd.s32 %s155, 1
    %p159 = scmp.eq.s32.totalorder %s16, 1
    %p160 = scmp.ne.s32.totalorder %s155, %s157
    %p161 = scmp.eq.s32.totalorder %s16, 0
    %p162 = por %p160, %p161
    %p163 = scmp.ne.s32.totalorder %s155, %s157
    %p164 = scmp.eq.s32.totalorder %s21, 1
    %p165 = por %p163, %p164
    %p166 = scmp.ne.s32.totalorder %s157, %s158
    %p167 = scmp.eq.s32.totalorder %s21, 0
    %p168 = por %p166, %p167
    %p169 = scmp.ne.s32.totalorder %s157, %s158
    %p170 = scmp.eq.s32.totalorder %s22, 1
    %p171 = por %p169, %p170
    %p173 = scmp.ne.s32.totalorder %s158, %s172
    %p174 = scmp.eq.s32.totalorder %s22, 0
    %p175 = por %p173, %p174
    %s177 = sadd.s32 %s176, 1
    %p180 = scmp.eq.s32.totalorder %s16, 1
    %p181 = scmp.ne.s32.totalorder %s176, %s178
    %p182 = scmp.eq.s32.totalorder %s16, 0
    %p183 = por %p181, %p182
    %p184 = scmp.ne.s32.totalorder %s176, %s178
    %p185 = scmp.eq.s32.totalorder %s21, 1
    %p186 = por %p184, %p185
    %p187 = scmp.ne.s32.totalorder %s178, %s179
    %p188 = scmp.eq.s32.totalorder %s21, 0
    %p189 = por %p187, %p188
    %p190 = scmp.ne.s32.totalorder %s178, %s179
    %p191 = scmp.eq.s32.totalorder %s22, 1
    %p192 = por %p190, %p191
    %p194 = scmp.ne.s32.totalorder %s179, %s193
    %p195 = scmp.eq.s32.totalorder %s22, 0
    %p196 = por %p194, %p195
    %s198 = sadd.s32 %s197, 1
    %p201 = scmp.eq.s32.totalorder %s16, 1
    %p202 = scmp.ne.s32.totalorder %s197, %s199
    %p203 = scmp.eq.s32.totalorder %s16, 0
    %p204 = por %p202, %p203
    %p205 = scmp.ne.s32.totalorder %s197, %s199
    %p206 = scmp.eq.s32.totalorder %s21, 1
    %p207 = por %p205, %p206
    %p208 = scmp.ne.s32.totalorder %s199, %s200
    %p209 = scmp.eq.s32.totalorder %s21, 0
    %p210 = por %p208, %p209
    %p211 = scmp.ne.s32.totalorder %s199, %s200
    %p212 = scmp.eq.s32.totalorder %s22, 1
    %p213 = por %p211, %p212
    %p215 = scmp.ne.s32.totalorder %s200, %s214
    %p216 = scmp.eq.s32.totalorder %s22, 0
    %p217 = por %p215, %p216
    %s219 = sadd.s32 %s218, 1
    %p222 = scmp.eq.s32.totalorder %s16, 1
    %p223 = scmp.ne.s32.totalorder %s218, %s220
    %p224 = scmp.eq.s32.totalorder %s16, 0
    %p225 = por %p223, %p224
    %p226 = scmp.ne.s32.totalorder %s218, %s220
    %p227 = scmp.eq.s32.totalorder %s21, 1
    %p228 = por %p226, %p227
    %p229 = scmp.ne.s32.totalorder %s220, %s221
    %p230 = scmp.eq.s32.totalorder %s21, 0
    %p231 = por %p229, %p230
    %p232 = scmp.ne.s32.totalorder %s220, %s221
    %p233 = scmp.eq.s32.totalorder %s22, 1
    %p234 = por %p232, %p233
    %p236 = scmp.ne.s32.totalorder %s221, %s235
    %p237 = scmp.eq.s32.totalorder %s22, 0
    %p238 = por %p236, %p237
    %s239 = ssub.s32 %s16, %s23
    %p240 = scmp.eq.s32.totalorder %s239, 0
    %s242 = sadd.s32 %s241, 1
    %s243 = scalar_select %p240, %s241, %s242
    %p246 = pneg %p240
    %p247 = scmp.eq.s32.totalorder %s16, 1
    %p248 = por %p246, %p247
    %p249 = scmp.ne.s32.totalorder %s241, %s244
    %p250 = scmp.eq.s32.totalorder %s16, 0
    %p251 = por %p249, %p250
    %p252 = scmp.ne.s32.totalorder %s241, %s244
    %p253 = scmp.eq.s32.totalorder %s21, 1
    %p254 = por %p252, %p253
    %p255 = scmp.ne.s32.totalorder %s244, %s245
    %p256 = scmp.eq.s32.totalorder %s21, 0
    %p257 = por %p255, %p256
    %p258 = scmp.ne.s32.totalorder %s244, %s245
    %p259 = scmp.eq.s32.totalorder %s22, 1
    %p260 = por %p258, %p259
    %p262 = scmp.ne.s32.totalorder %s245, %s261
    %p263 = scmp.eq.s32.totalorder %s22, 0
    %p264 = por %p262, %p263
    %p265 = scmp.le.s32.totalorder 1, %s16
    %p266 = scmp.lt.s32.totalorder %s16, 3
    %p267 = pnand %p265, %p266
    %p268 = pneg %p267
    // Predicated region
    $region9: #{global_height_conv_forward.1} parent=5 // pred_check
      _
    $region10: #{global_height_conv_forward.1} parent=5 // pred_check_branch
      %270 = sbr.rel (%p267) target = $region12
    $region11: #{global_height_conv_forward.1} parent=5 // pred_region
      %s271 = ssub.s32 %s16, 1
      // Predicated region
      $region13: #{global_height_conv_forward.1} parent=11 // pred_check
        %p272 = pneg %p63
      $region14: #{global_height_conv_forward.1} parent=11 // pred_check_branch
        %274 = sbr.rel (%p272) target = $region16
      $region15: #{global_height_conv_forward.1} parent=11 // pred_region
        _
      $region16: #{global_height_conv_forward.1} parent=11 // pred_fallthru
        _
      // Predicated region
      $region17: #{global_height_conv_forward.1} parent=11 // pred_check
        %p275 = pneg %p84
      $region18: #{global_height_conv_forward.1} parent=11 // pred_check_branch
        %277 = sbr.rel (%p275) target = $region20
      $region19: #{global_height_conv_forward.1} parent=11 // pred_region
        _
      $region20: #{global_height_conv_forward.1} parent=11 // pred_fallthru
        _
      // Predicated region
      $region21: #{global_height_conv_forward.1} parent=11 // pred_check
        %p278 = pneg %p105
      $region22: #{global_height_conv_forward.1} parent=11 // pred_check_branch
        %280 = sbr.rel (%p278) target = $region24
      $region23: #{global_height_conv_forward.1} parent=11 // pred_region
        _
      $region24: #{global_height_conv_forward.1} parent=11 // pred_fallthru
        _
      // Predicated region
      $region25: #{global_height_conv_forward.1} parent=11 // pred_check
        %p281 = pneg %p126
      $region26: #{global_height_conv_forward.1} parent=11 // pred_check_branch
        %283 = sbr.rel (%p281) target = $region28
      $region27: #{global_height_conv_forward.1} parent=11 // pred_region
        _
      $region28: #{global_height_conv_forward.1} parent=11 // pred_fallthru
        _
      // Predicated region
      $region29: #{global_height_conv_forward.1} parent=11 // pred_check
        %p284 = pneg %p147
      $region30: #{global_height_conv_forward.1} parent=11 // pred_check_branch
        %286 = sbr.rel (%p284) target = $region32
      $region31: #{global_height_conv_forward.1} parent=11 // pred_region
        _
      $region32: #{global_height_conv_forward.1} parent=11 // pred_fallthru
        _
      // Predicated region
      $region33: #{global_height_conv_forward.1} parent=11 // pred_check
        %p287 = pneg %p168
      $region34: #{global_height_conv_forward.1} parent=11 // pred_check_branch
        %289 = sbr.rel (%p287) target = $region36
      $region35: #{global_height_conv_forward.1} parent=11 // pred_region
        _
      $region36: #{global_height_conv_forward.1} parent=11 // pred_fallthru
        _
      // Predicated region
      $region37: #{global_height_conv_forward.1} parent=11 // pred_check
        %p290 = pneg %p189
      $region38: #{global_height_conv_forward.1} parent=11 // pred_check_branch
        %292 = sbr.rel (%p290) target = $region40
      $region39: #{global_height_conv_forward.1} parent=11 // pred_region
        _
      $region40: #{global_height_conv_forward.1} parent=11 // pred_fallthru
        _
      // Predicated region
      $region41: #{global_height_conv_forward.1} parent=11 // pred_check
        %p293 = pneg %p210
      $region42: #{global_height_conv_forward.1} parent=11 // pred_check_branch
        %295 = sbr.rel (%p293) target = $region44
      $region43: #{global_height_conv_forward.1} parent=11 // pred_region
        _
      $region44: #{global_height_conv_forward.1} parent=11 // pred_fallthru
        _
      // Predicated region
      $region45: #{global_height_conv_forward.1} parent=11 // pred_check
        %p296 = pneg %p231
      $region46: #{global_height_conv_forward.1} parent=11 // pred_check_branch
        %298 = sbr.rel (%p296) target = $region48
      $region47: #{global_height_conv_forward.1} parent=11 // pred_region
        _
      $region48: #{global_height_conv_forward.1} parent=11 // pred_fallthru
        _
    $region12: #{global_height_conv_forward.1} parent=5 // pred_fallthru
      _
    %p299 = scmp.lt.s32.totalorder %s16, 2
    // Predicated region
    $region49: #{global_height_conv_forward.1} parent=5 // pred_check
      %p300 = pneg %p299
    $region50: #{global_height_conv_forward.1} parent=5 // pred_check_branch
      %302 = sbr.rel (%p300) target = $region52
    $region51: #{global_height_conv_forward.1} parent=5 // pred_region
      // Predicated region
      $region53: #{global_height_conv_forward.1} parent=51 // pred_check
        %p303 = pneg %p36
      $region54: #{global_height_conv_forward.1} parent=51 // pred_check_branch
        %305 = sbr.rel (%p303) target = $region56
      $region55: #{global_height_conv_forward.1} parent=51 // pred_region
        %p306 = scmp.lt.s32.totalorder %s16, 1
        %s307 = scalar_select %p306, %s16, 1
        %s308 = smul.addr %s307, 8
        %s309 = smul.addr %s308, 8
        %s310 = scalar_lea.vmem %s0, %s309
      $region56: #{global_height_conv_forward.1} parent=51 // pred_fallthru
        _
    $region52: #{global_height_conv_forward.1} parent=5 // pred_fallthru
      _
    %p311 = scmp.le.s32.totalorder 1, %s16
    %p312 = scmp.lt.s32.totalorder %s16, 3
    %p313 = pnand %p311, %p312
    %p314 = pneg %p313
    // Predicated region
    $region57: #{global_height_conv_forward.1} parent=5 // pred_check
      _
    $region58: #{global_height_conv_forward.1} parent=5 // pred_check_branch
      %316 = sbr.rel (%p313) target = $region60
    $region59: #{global_height_conv_forward.1} parent=5 // pred_region
      %s317 = ssub.s32 %s16, 1
      %p318 = scmp.lt.s32.totalorder %s21, 1
      %s319 = scalar_select %p318, %s21, 1
      %s320 = smul.addr %s319, 8
      %s321 = smul.addr %s320, 8
      %s322 = scalar_lea.vmem %s0, %s321
      %p323 = pneg %p42
      %p324 = pneg %p39
      %p325 = pneg %p63
      %p326 = pneg %p60
      %p327 = pneg %p84
      %p328 = pneg %p81
      %p329 = pneg %p105
      %p330 = pneg %p102
      %p331 = pneg %p126
      %p332 = pneg %p123
      %p333 = pneg %p147
      %p334 = pneg %p144
      %p335 = pneg %p168
      %p336 = pneg %p165
      %p337 = pneg %p189
      %p338 = pneg %p186
      %p339 = pneg %p210
      %p340 = pneg %p207
      %p341 = pneg %p231
      %p342 = pneg %p228
      %p343 = pneg %p257
      %p344 = pneg %p254
      %p345 = scmp.lt.s32.totalorder %s21, 1
      %s346 = scalar_select %p345, %s21, 1
      %s347 = smul.addr %s346, 8
      %s348 = scalar_lea.vmem %s10, %s347
      %p349 = scmp.lt.s32.totalorder %s21, 1
      %s350 = scalar_select %p349, %s21, 1
      %s351 = smul.addr %s350, 8
      %s352 = smul.addr %s351, 8
      %s353 = scalar_lea.vmem %s0, %s352
      %p354 = scmp.lt.s32.totalorder %s21, 1
      %s355 = scalar_select %p354, %s21, 1
      %s356 = smul.addr %s355, 8
      %s357 = scalar_lea.vmem %s10, %s356
      %v358 = vlaneseq
      %v359 = vand.u32 %v358, 127
      %v360 = vadd.s32 %v359, 128
      %v361 = vadd.s32 %v359, 256
      %v362 = vadd.s32 %v359, 384
      %vm363 = vcmp.lt.s32.totalorder %v359, 0
      %v364 = vsub.s32 0, %v359
      %v365 = vsel %vm363, %v364, %v359
      %v366 = vshrl.u32 %v365, 4
      %v367 = vand.u32 %v365, 15
      %v368 = vsub.s32 0, %v367
      %v369 = vsel %vm363, %v368, %v367
      %vm370 = vcmp.lt.s32.totalorder %v360, 0
      %v371 = vsub.s32 0, %v360
      %v372 = vsel %vm370, %v371, %v360
      %v373 = vshrl.u32 %v372, 4
      %v374 = vand.u32 %v372, 15
      %v375 = vsub.s32 0, %v374
      %v376 = vsel %vm370, %v375, %v374
      %vm377 = vcmp.lt.s32.totalorder %v361, 0
      %v378 = vsub.s32 0, %v361
      %v379 = vsel %vm377, %v378, %v361
      %v380 = vshrl.u32 %v379, 4
      %v381 = vand.u32 %v379, 15
      %v382 = vsub.s32 0, %v381
      %v383 = vsel %vm377, %v382, %v381
      %vm384 = vcmp.lt.s32.totalorder %v362, 0
      %v385 = vsub.s32 0, %v362
      %v386 = vsel %vm384, %v385, %v362
      %v387 = vshrl.u32 %v386, 4
      %v388 = vand.u32 %v386, 15
      %v389 = vsub.s32 0, %v388
      %v390 = vsel %vm384, %v389, %v388
      %vm391 = vcmp.ne.s32.totalorder %v369, 0
      %vm392 = vcmp.ne.s32.totalorder %v376, 0
      %vm393 = vcmp.ne.s32.totalorder %v383, 0
      %vm394 = vcmp.ne.s32.totalorder %v390, 0
      %vm395 = vcmp.lt.s32.totalorder %v369, 0
      %vm396 = vcmp.lt.s32.totalorder %v376, 0
      %vm397 = vcmp.lt.s32.totalorder %v383, 0
      %vm398 = vcmp.lt.s32.totalorder %v390, 0
      %vm399 = vmand %vm395, %vm391
      %vm400 = vmand %vm396, %vm392
      %vm401 = vmand %vm397, %vm393
      %vm402 = vmand %vm398, %vm394
      %v403 = vadd.s32 %v369, 16
      %v404 = vadd.s32 %v376, 16
      %v405 = vadd.s32 %v383, 16
      %v406 = vadd.s32 %v390, 16
      %v407 = vsel %vm399, %v403, %v369
      %v408 = vsel %vm400, %v404, %v376
      %v409 = vsel %vm401, %v405, %v383
      %v410 = vsel %vm402, %v406, %v390
      %vm411 = vcmp.eq.s32.totalorder %v407, 0
      %vm412 = vcmp.eq.s32.totalorder %v408, 0
      %vm413 = vcmp.eq.s32.totalorder %v409, 0
      %vm414 = vcmp.eq.s32.totalorder %v410, 0
      %vm415 = vcmp.eq.s32.totalorder %v407, 15
      %vm416 = vcmp.eq.s32.totalorder %v408, 15
      %vm417 = vcmp.eq.s32.totalorder %v409, 15
      %vm418 = vcmp.eq.s32.totalorder %v410, 15
      %v419 = vld [vmem:[%s353] sm:$0xff]
      %v420 = vld [vmem:[%s353 + $0x8] sm:$0xff]
      %v421 = vld [vmem:[%s353 + $0x10] sm:$0xff]
      %v422 = vld [vmem:[%s353 + $0x18] sm:$0xff]
      %v423 = vld [vmem:[%s353 + $0x20] sm:$0xff]
      %v424 = vld [vmem:[%s353 + $0x28] sm:$0xff]
      %v425 = vld [vmem:[%s353 + $0x30] sm:$0xff]
      %v426 = vld [vmem:[%s353 + $0x38] sm:$0xff]
      %427 = vrot.lane.b32.xlu0 %v419, 113
      %v428 = vpop.permute.xlu0 %427
      %429 = vrot.lane.b32.xlu0 %v423, 113
      %v430 = vpop.permute.xlu0 %429
      %431 = vrot.lane.b32.xlu0 %v420, 113
      %v432 = vpop.permute.xlu0 %431
      %433 = vrot.lane.b32.xlu0 %v424, 113
      %v434 = vpop.permute.xlu0 %433
      %435 = vrot.lane.b32.xlu0 %v421, 113
      %v436 = vpop.permute.xlu0 %435
      %437 = vrot.lane.b32.xlu0 %v425, 113
      %v438 = vpop.permute.xlu0 %437
      %439 = vrot.lane.b32.xlu0 %v422, 113
      %v440 = vpop.permute.xlu0 %439
      %441 = vrot.lane.b32.xlu0 %v426, 113
      %v442 = vpop.permute.xlu0 %441
      %vm443 = vcmp.lt.s32.totalorder %v359, 113
      %v444 = vsel %vm443, %v436, %v440
      %v445 = vsel %vm443, %v438, %v442
      %v446 = vsel %vm443, %v432, %v436
      %v447 = vsel %vm443, %v434, %v438
      %v448 = vsel %vm443, %v428, %v432
      %v449 = vsel %vm443, %v430, %v434
      %v450 = vsel %vm443, %v440, %v428
      %v451 = vsel %vm443, %v442, %v430
      %452 = vrot.lane.b32.xlu0 %v419, 1
      %v453 = vpop.permute.xlu0 %452
      %454 = vrot.lane.b32.xlu0 %v423, 1
      %v455 = vpop.permute.xlu0 %454
      %456 = vrot.lane.b32.xlu0 %v420, 1
      %v457 = vpop.permute.xlu0 %456
      %458 = vrot.lane.b32.xlu0 %v424, 1
      %v459 = vpop.permute.xlu0 %458
      %460 = vrot.lane.b32.xlu0 %v421, 1
      %v461 = vpop.permute.xlu0 %460
      %462 = vrot.lane.b32.xlu0 %v425, 1
      %v463 = vpop.permute.xlu0 %462
      %464 = vrot.lane.b32.xlu0 %v422, 1
      %v465 = vpop.permute.xlu0 %464
      %466 = vrot.lane.b32.xlu0 %v426, 1
      %v467 = vpop.permute.xlu0 %466
      %vm468 = vcmp.lt.s32.totalorder %v359, 1
      %v469 = vsel %vm468, %v461, %v465
      %v470 = vsel %vm468, %v463, %v467
      %v471 = vsel %vm468, %v457, %v461
      %v472 = vsel %vm468, %v459, %v463
      %v473 = vsel %vm468, %v453, %v457
      %v474 = vsel %vm468, %v455, %v459
      %v475 = vsel %vm468, %v465, %v453
      %v476 = vsel %vm468, %v467, %v455
      %v477 = vsel %vm411, 1, 0
      %v478 = vsel %vm412, 1, 0
      %v479 = vsel %vm413, 1, 0
      %v480 = vsel %vm414, 1, 0
      %vm481 = vcmp.eq.s32.totalorder %v477, 1
      %vm482 = vcmp.eq.s32.totalorder %v478, 1
      %vm483 = vcmp.eq.s32.totalorder %v479, 1
      %vm484 = vcmp.eq.s32.totalorder %v480, 1
      %v485 = vsel %vm481, %v448, %v475
      %v486 = vsel %vm482, %v446, %v473
      %v487 = vsel %vm483, %v444, %v471
      %v488 = vsel %vm484, %v450, %v469
      %v489 = vsel %vm481, %v449, %v476
      %v490 = vsel %vm482, %v447, %v474
      %v491 = vsel %vm483, %v445, %v472
      %v492 = vsel %vm484, %v451, %v470
      %493 = vrot.lane.b32.xlu0 %v419, 15
      %v494 = vpop.permute.xlu0 %493
      %495 = vrot.lane.b32.xlu0 %v423, 15
      %v496 = vpop.permute.xlu0 %495
      %497 = vrot.lane.b32.xlu0 %v420, 15
      %v498 = vpop.permute.xlu0 %497
      %499 = vrot.lane.b32.xlu0 %v424, 15
      %v500 = vpop.permute.xlu0 %499
      %501 = vrot.lane.b32.xlu0 %v421, 15
      %v502 = vpop.permute.xlu0 %501
      %503 = vrot.lane.b32.xlu0 %v425, 15
      %v504 = vpop.permute.xlu0 %503
      %505 = vrot.lane.b32.xlu0 %v422, 15
      %v506 = vpop.permute.xlu0 %505
      %507 = vrot.lane.b32.xlu0 %v426, 15
      %v508 = vpop.permute.xlu0 %507
      %vm509 = vcmp.lt.s32.totalorder %v359, 15
      %v510 = vsel %vm509, %v502, %v506
      %v511 = vsel %vm509, %v504, %v508
      %v512 = vsel %vm509, %v498, %v502
      %v513 = vsel %vm509, %v500, %v504
      %v514 = vsel %vm509, %v494, %v498
      %v515 = vsel %vm509, %v496, %v500
      %v516 = vsel %vm509, %v506, %v494
      %v517 = vsel %vm509, %v508, %v496
      %518 = vrot.lane.b32.xlu0 %v419, 127
      %v519 = vpop.permute.xlu0 %518
      %520 = vrot.lane.b32.xlu0 %v423, 127
      %v521 = vpop.permute.xlu0 %520
      %522 = vrot.lane.b32.xlu0 %v420, 127
      %v523 = vpop.permute.xlu0 %522
      %524 = vrot.lane.b32.xlu0 %v424, 127
      %v525 = vpop.permute.xlu0 %524
      %526 = vrot.lane.b32.xlu0 %v421, 127
      %v527 = vpop.permute.xlu0 %526
      %528 = vrot.lane.b32.xlu0 %v425, 127
      %v529 = vpop.permute.xlu0 %528
      %530 = vrot.lane.b32.xlu0 %v422, 127
      %v531 = vpop.permute.xlu0 %530
      %532 = vrot.lane.b32.xlu0 %v426, 127
      %v533 = vpop.permute.xlu0 %532
      %vm534 = vcmp.lt.s32.totalorder %v359, 127
      %v535 = vsel %vm534, %v527, %v531
      %v536 = vsel %vm534, %v529, %v533
      %v537 = vsel %vm534, %v523, %v527
      %v538 = vsel %vm534, %v525, %v529
      %v539 = vsel %vm534, %v519, %v523
      %v540 = vsel %vm534, %v521, %v525
      %v541 = vsel %vm534, %v531, %v519
      %v542 = vsel %vm534, %v533, %v521
      %v543 = vsel %vm415, 1, 0
      %v544 = vsel %vm416, 1, 0
      %v545 = vsel %vm417, 1, 0
      %v546 = vsel %vm418, 1, 0
      %vm547 = vcmp.eq.s32.totalorder %v543, 1
      %vm548 = vcmp.eq.s32.totalorder %v544, 1
      %vm549 = vcmp.eq.s32.totalorder %v545, 1
      %vm550 = vcmp.eq.s32.totalorder %v546, 1
      %v551 = vsel %vm547, %v516, %v539
      %v552 = vsel %vm548, %v514, %v537
      %v553 = vsel %vm549, %v512, %v535
      %v554 = vsel %vm550, %v510, %v541
      %v555 = vsel %vm547, %v517, %v540
      %v556 = vsel %vm548, %v515, %v538
      %v557 = vsel %vm549, %v513, %v536
      %v558 = vsel %vm550, %v511, %v542
      %vm559 = vcmp.lt.s32.totalorder %v359, 16
      %vm560 = vcmp.lt.s32.totalorder %v360, 16
      %vm561 = vcmp.lt.s32.totalorder %v361, 16
      %vm562 = vcmp.lt.s32.totalorder %v362, 16
      %vm563 = vcmp.ge.s32.totalorder %v359, 496
      %vm564 = vcmp.ge.s32.totalorder %v360, 496
      %vm565 = vcmp.ge.s32.totalorder %v361, 496
      %vm566 = vcmp.ge.s32.totalorder %v362, 496
      %567 = vrot.lane.b32.xlu0 %v485, 16
      %v568 = vpop.permute.xlu0 %567
      %569 = vrot.lane.b32.xlu0 %v489, 16
      %v570 = vpop.permute.xlu0 %569
      %571 = vrot.lane.b32.xlu0 %v486, 16
      %v572 = vpop.permute.xlu0 %571
      %573 = vrot.lane.b32.xlu0 %v490, 16
      %v574 = vpop.permute.xlu0 %573
      %575 = vrot.lane.b32.xlu0 %v487, 16
      %v576 = vpop.permute.xlu0 %575
      %577 = vrot.lane.b32.xlu0 %v491, 16
      %v578 = vpop.permute.xlu0 %577
      %579 = vrot.lane.b32.xlu0 %v488, 16
      %v580 = vpop.permute.xlu0 %579
      %581 = vrot.lane.b32.xlu0 %v492, 16
      %v582 = vpop.permute.xlu0 %581
      %v583 = vsel %vm559, %v576, %v580
      %v584 = vsel %vm559, %v578, %v582
      %v585 = vsel %vm559, %v572, %v576
      %v586 = vsel %vm559, %v574, %v578
      %v587 = vsel %vm559, %v568, %v572
      %v588 = vsel %vm559, %v570, %v574
      %v589 = vsel %vm559, %v580, %v568
      %v590 = vsel %vm559, %v582, %v570
      %v591 = vsel %vm559, 1, 0
      %v592 = vsel %vm560, 1, 0
      %v593 = vsel %vm561, 1, 0
      %v594 = vsel %vm562, 1, 0
      %vm595 = vcmp.eq.s32.totalorder %v591, 1
      %vm596 = vcmp.eq.s32.totalorder %v592, 1
      %vm597 = vcmp.eq.s32.totalorder %v593, 1
      %vm598 = vcmp.eq.s32.totalorder %v594, 1
      %v599 = vsel %vm595, 0.0, %v589
      %v600 = vsel %vm596, 0.0, %v587
      %v601 = vsel %vm597, 0.0, %v585
      %v602 = vsel %vm598, 0.0, %v583
      %v603 = vsel %vm595, 0.0, %v590
      %v604 = vsel %vm596, 0.0, %v588
      %v605 = vsel %vm597, 0.0, %v586
      %v606 = vsel %vm598, 0.0, %v584
      %607 = vrot.lane.b32.xlu0 %v419, 16
      %v608 = vpop.permute.xlu0 %607
      %609 = vrot.lane.b32.xlu0 %v423, 16
      %v610 = vpop.permute.xlu0 %609
      %611 = vrot.lane.b32.xlu0 %v420, 16
      %v612 = vpop.permute.xlu0 %611
      %613 = vrot.lane.b32.xlu0 %v424, 16
      %v614 = vpop.permute.xlu0 %613
      %615 = vrot.lane.b32.xlu0 %v421, 16
      %v616 = vpop.permute.xlu0 %615
      %617 = vrot.lane.b32.xlu0 %v425, 16
      %v618 = vpop.permute.xlu0 %617
      %619 = vrot.lane.b32.xlu0 %v422, 16
      %v620 = vpop.permute.xlu0 %619
      %621 = vrot.lane.b32.xlu0 %v426, 16
      %v622 = vpop.permute.xlu0 %621
      %v623 = vsel %vm559, %v616, %v620
      %v624 = vsel %vm559, %v618, %v622
      %v625 = vsel %vm559, %v612, %v616
      %v626 = vsel %vm559, %v614, %v618
      %v627 = vsel %vm559, %v608, %v612
      %v628 = vsel %vm559, %v610, %v614
      %v629 = vsel %vm559, %v620, %v608
      %v630 = vsel %vm559, %v622, %v610
      %v631 = vsel %vm595, 0.0, %v629
      %v632 = vsel %vm596, 0.0, %v627
      %v633 = vsel %vm597, 0.0, %v625
      %v634 = vsel %vm598, 0.0, %v623
      %v635 = vsel %vm595, 0.0, %v630
      %v636 = vsel %vm596, 0.0, %v628
      %v637 = vsel %vm597, 0.0, %v626
      %v638 = vsel %vm598, 0.0, %v624
      %639 = vrot.lane.b32.xlu0 %v551, 16
      %v640 = vpop.permute.xlu0 %639
      %641 = vrot.lane.b32.xlu0 %v555, 16
      %v642 = vpop.permute.xlu0 %641
      %643 = vrot.lane.b32.xlu0 %v552, 16
      %v644 = vpop.permute.xlu0 %643
      %645 = vrot.lane.b32.xlu0 %v556, 16
      %v646 = vpop.permute.xlu0 %645
      %647 = vrot.lane.b32.xlu0 %v553, 16
      %v648 = vpop.permute.xlu0 %647
      %649 = vrot.lane.b32.xlu0 %v557, 16
      %v650 = vpop.permute.xlu0 %649
      %651 = vrot.lane.b32.xlu0 %v554, 16
      %v652 = vpop.permute.xlu0 %651
      %653 = vrot.lane.b32.xlu0 %v558, 16
      %v654 = vpop.permute.xlu0 %653
      %v655 = vsel %vm559, %v648, %v652
      %v656 = vsel %vm559, %v650, %v654
      %v657 = vsel %vm559, %v644, %v648
      %v658 = vsel %vm559, %v646, %v650
      %v659 = vsel %vm559, %v640, %v644
      %v660 = vsel %vm559, %v642, %v646
      %v661 = vsel %vm559, %v652, %v640
      %v662 = vsel %vm559, %v654, %v642
      %v663 = vsel %vm595, 0.0, %v661
      %v664 = vsel %vm596, 0.0, %v659
      %v665 = vsel %vm597, 0.0, %v657
      %v666 = vsel %vm598, 0.0, %v655
      %v667 = vsel %vm595, 0.0, %v662
      %v668 = vsel %vm596, 0.0, %v660
      %v669 = vsel %vm597, 0.0, %v658
      %v670 = vsel %vm598, 0.0, %v656
      %671 = vrot.lane.b32.xlu0 %v485, 112
      %v672 = vpop.permute.xlu0 %671
      %673 = vrot.lane.b32.xlu0 %v489, 112
      %v674 = vpop.permute.xlu0 %673
      %675 = vrot.lane.b32.xlu0 %v486, 112
      %v676 = vpop.permute.xlu0 %675
      %677 = vrot.lane.b32.xlu0 %v490, 112
      %v678 = vpop.permute.xlu0 %677
      %679 = vrot.lane.b32.xlu0 %v487, 112
      %v680 = vpop.permute.xlu0 %679
      %681 = vrot.lane.b32.xlu0 %v491, 112
      %v682 = vpop.permute.xlu0 %681
      %683 = vrot.lane.b32.xlu0 %v488, 112
      %v684 = vpop.permute.xlu0 %683
      %685 = vrot.lane.b32.xlu0 %v492, 112
      %v686 = vpop.permute.xlu0 %685
      %vm687 = vcmp.lt.s32.totalorder %v359, 112
      %v688 = vsel %vm687, %v680, %v684
      %v689 = vsel %vm687, %v682, %v686
      %v690 = vsel %vm687, %v676, %v680
      %v691 = vsel %vm687, %v678, %v682
      %v692 = vsel %vm687, %v672, %v676
      %v693 = vsel %vm687, %v674, %v678
      %v694 = vsel %vm687, %v684, %v672
      %v695 = vsel %vm687, %v686, %v674
      %v696 = vsel %vm563, 1, 0
      %v697 = vsel %vm564, 1, 0
      %v698 = vsel %vm565, 1, 0
      %v699 = vsel %vm566, 1, 0
      %vm700 = vcmp.eq.s32.totalorder %v696, 1
      %vm701 = vcmp.eq.s32.totalorder %v697, 1
      %vm702 = vcmp.eq.s32.totalorder %v698, 1
      %vm703 = vcmp.eq.s32.totalorder %v699, 1
      %v704 = vsel %vm700, 0.0, %v692
      %v705 = vsel %vm701, 0.0, %v690
      %v706 = vsel %vm702, 0.0, %v688
      %v707 = vsel %vm703, 0.0, %v694
      %v708 = vsel %vm700, 0.0, %v693
      %v709 = vsel %vm701, 0.0, %v691
      %v710 = vsel %vm702, 0.0, %v689
      %v711 = vsel %vm703, 0.0, %v695
      %712 = vrot.lane.b32.xlu0 %v419, 112
      %v713 = vpop.permute.xlu0 %712
      %714 = vrot.lane.b32.xlu0 %v423, 112
      %v715 = vpop.permute.xlu0 %714
      %716 = vrot.lane.b32.xlu0 %v420, 112
      %v717 = vpop.permute.xlu0 %716
      %718 = vrot.lane.b32.xlu0 %v424, 112
      %v719 = vpop.permute.xlu0 %718
      %720 = vrot.lane.b32.xlu0 %v421, 112
      %v721 = vpop.permute.xlu0 %720
      %722 = vrot.lane.b32.xlu0 %v425, 112
      %v723 = vpop.permute.xlu0 %722
      %724 = vrot.lane.b32.xlu0 %v422, 112
      %v725 = vpop.permute.xlu0 %724
      %726 = vrot.lane.b32.xlu0 %v426, 112
      %v727 = vpop.permute.xlu0 %726
      %v728 = vsel %vm687, %v721, %v725
      %v729 = vsel %vm687, %v723, %v727
      %v730 = vsel %vm687, %v717, %v721
      %v731 = vsel %vm687, %v719, %v723
      %v732 = vsel %vm687, %v713, %v717
      %v733 = vsel %vm687, %v715, %v719
      %v734 = vsel %vm687, %v725, %v713
      %v735 = vsel %vm687, %v727, %v715
      %v736 = vsel %vm700, 0.0, %v732
      %v737 = vsel %vm701, 0.0, %v730
      %v738 = vsel %vm702, 0.0, %v728
      %v739 = vsel %vm703, 0.0, %v734
      %v740 = vsel %vm700, 0.0, %v733
      %v741 = vsel %vm701, 0.0, %v731
      %v742 = vsel %vm702, 0.0, %v729
      %v743 = vsel %vm703, 0.0, %v735
      %744 = vrot.lane.b32.xlu0 %v551, 112
      %v745 = vpop.permute.xlu0 %744
      %746 = vrot.lane.b32.xlu0 %v555, 112
      %v747 = vpop.permute.xlu0 %746
      %748 = vrot.lane.b32.xlu0 %v552, 112
      %v749 = vpop.permute.xlu0 %748
      %750 = vrot.lane.b32.xlu0 %v556, 112
      %v751 = vpop.permute.xlu0 %750
      %752 = vrot.lane.b32.xlu0 %v553, 112
      %v753 = vpop.permute.xlu0 %752
      %754 = vrot.lane.b32.xlu0 %v557, 112
      %v755 = vpop.permute.xlu0 %754
      %756 = vrot.lane.b32.xlu0 %v554, 112
      %v757 = vpop.permute.xlu0 %756
      %758 = vrot.lane.b32.xlu0 %v558, 112
      %v759 = vpop.permute.xlu0 %758
      %v760 = vsel %vm687, %v753, %v757
      %v761 = vsel %vm687, %v755, %v759
      %v762 = vsel %vm687, %v749, %v753
      %v763 = vsel %vm687, %v751, %v755
      %v764 = vsel %vm687, %v745, %v749
      %v765 = vsel %vm687, %v747, %v751
      %v766 = vsel %vm687, %v757, %v745
      %v767 = vsel %vm687, %v759, %v747
      %v768 = vsel %vm700, 0.0, %v764
      %v769 = vsel %vm701, 0.0, %v762
      %v770 = vsel %vm702, 0.0, %v760
      %v771 = vsel %vm703, 0.0, %v766
      %v772 = vsel %vm700, 0.0, %v765
      %v773 = vsel %vm701, 0.0, %v763
      %v774 = vsel %vm702, 0.0, %v761
      %v775 = vsel %vm703, 0.0, %v767
      %v776 = vld [vmem:[%s1] sm:$0xff]
      %v777 = vld [vmem:[%s1 + $0x8] sm:$0xff]
      %v778 = vld [vmem:[%s2] sm:$0xff]
      %780 = vset.pattern.permute.xlu0 0
      %781 = vperm.xlu0 %780, %v778
      %v782 = vpop.permute.xlu0 %781
      %vm784 = vcmask 130048
      %v786 = vsel %vm784, %v777, 0
      %788 = vmatprep.subr.mxu0 %v600
      %789 = vmatpush1.msra.mxu0 %v599
      %790 = vmatprep.subr.mxu0 %v604
      %791 = vmatpush1.msra.mxu0 %v603
      %792 = vmatprep.subr.mxu0 %v632
      %793 = vmatpush1.msra.mxu0 %v631
      %794 = vmatprep.subr.mxu0 %v636
      %795 = vmatpush1.msra.mxu0 %v635
      %796 = vmatprep.subr.mxu0 %v664
      %797 = vmatpush1.msra.mxu0 %v663
      %798 = vmatprep.subr.mxu0 %v668
      %799 = vmatpush1.msra.mxu0 %v667
      %800 = vmatprep.subr.mxu0 %v486
      %801 = vmatpush1.msra.mxu0 %v485
      %802 = vmatprep.subr.mxu0 %v490
      %803 = vmatpush1.msra.mxu0 %v489
      %804 = vmatprep.subr.mxu0 %v420
      %805 = vmatpush1.msra.mxu0 %v419
      %806 = vmatprep.subr.mxu0 %v424
      %807 = vmatpush1.msra.mxu0 %v423
      %808 = vmatprep.subr.mxu0 %v552
      %809 = vmatpush1.msra.mxu0 %v551
      %810 = vmatprep.subr.mxu0 %v556
      %811 = vmatpush1.msra.mxu0 %v555
      %812 = vmatprep.subr.mxu0 %v705
      %813 = vmatpush1.msra.mxu0 %v704
      %814 = vmatprep.subr.mxu0 %v709
      %815 = vmatpush1.msra.mxu0 %v708
      %816 = vmatprep.subr.mxu0 %v737
      %817 = vmatpush1.msra.mxu0 %v736
      %818 = vmatprep.subr.mxu0 %v741
      %819 = vmatpush1.msra.mxu0 %v740
      %820 = vmatprep.subr.mxu0 %v769
      %821 = vmatpush1.msra.mxu0 %v768
      %822 = vmatprep.subr.mxu0 %v773
      %823 = vmatpush1.msra.mxu0 %v772
      %824 = vmatprep.subr.mxu0 0.0
      %825 = vmatpush1.msra.mxu0 0.0
      %826 = vmatprep.subr.mxu0 0.0
      %827 = vmatpush1.msra.mxu0 0.0
      %828 = vmatprep.subr.mxu0 0.0
      %829 = vmatpush1.msra.mxu0 0.0
      %830 = vmatprep.subr.mxu0 0.0
      %831 = vmatpush1.msra.mxu0 0.0
      %832 = vmatprep.subr.mxu0 0.0
      %833 = vmatpush1.msra.mxu0 0.0
      %834 = vmatprep.subr.mxu0 0.0
      %835 = vmatpush1.msra.mxu0 0.0
      %836 = vmatprep.subr.mxu0 0.0
      %837 = vmatpush1.msra.mxu0 0.0
      %838 = vmatprep.subr.mxu0 0.0
      %839 = vmatpush1.msra.mxu0 0.0
      %840 = vmatprep.subr.mxu0 0.0
      %841 = vmatpush1.msra.mxu0 0.0
      %842 = vmatprep.subr.mxu0 0.0
      %843 = vmatpush1.msra.mxu0 0.0
      %844 = vmatprep.subr.mxu0 0.0
      %845 = vmatpush1.msra.mxu0 0.0
      %846 = vmatprep.subr.mxu0 0.0
      %847 = vmatpush1.msra.mxu0 0.0
      %848 = vmatprep.subr.mxu0 0.0
      %849 = vmatpush1.msra.mxu0 0.0
      %850 = vmatprep.subr.mxu0 0.0
      %851 = vmatpush1.msra.mxu0 0.0
      %852 = vmatprep.mubr.f32.mxu0 %v786
      %853 = vmatmul.mubr.f32.gmra.mrb[0].mxu0 %v776
      %v854 = vpop.f32.mrb[0].mxu0
      %v855 = vadd.f32 %v782, %v854
      %v856 = vpop.f32.mrb[0].mxu0
      %v857 = vadd.f32 %v782, %v856
      %858 = vdwg.mxu0
      %859 = vmatprep.subr.mxu0 %v602
      %860 = vmatpush1.msra.mxu0 %v601
      %861 = vmatprep.subr.mxu0 %v606
      %862 = vmatpush1.msra.mxu0 %v605
      %863 = vmatprep.subr.mxu0 %v634
      %864 = vmatpush1.msra.mxu0 %v633
      %865 = vmatprep.subr.mxu0 %v638
      %866 = vmatpush1.msra.mxu0 %v637
      %867 = vmatprep.subr.mxu0 %v666
      %868 = vmatpush1.msra.mxu0 %v665
      %869 = vmatprep.subr.mxu0 %v670
      %870 = vmatpush1.msra.mxu0 %v669
      %871 = vmatprep.subr.mxu0 %v488
      %872 = vmatpush1.msra.mxu0 %v487
      %873 = vmatprep.subr.mxu0 %v492
      %874 = vmatpush1.msra.mxu0 %v491
      %875 = vmatprep.subr.mxu0 %v422
      %876 = vmatpush1.msra.mxu0 %v421
      %877 = vmatprep.subr.mxu0 %v426
      %878 = vmatpush1.msra.mxu0 %v425
      %879 = vmatprep.subr.mxu0 %v554
      %880 = vmatpush1.msra.mxu0 %v553
      %881 = vmatprep.subr.mxu0 %v558
      %882 = vmatpush1.msra.mxu0 %v557
      %883 = vmatprep.subr.mxu0 %v707
      %884 = vmatpush1.msra.mxu0 %v706
      %885 = vmatprep.subr.mxu0 %v711
      %886 = vmatpush1.msra.mxu0 %v710
      %887 = vmatprep.subr.mxu0 %v739
      %888 = vmatpush1.msra.mxu0 %v738
      %889 = vmatprep.subr.mxu0 %v743
      %890 = vmatpush1.msra.mxu0 %v742
      %891 = vmatprep.subr.mxu0 %v771
      %892 = vmatpush1.msra.mxu0 %v770
      %893 = vmatprep.subr.mxu0 %v775
      %894 = vmatpush1.msra.mxu0 %v774
      %895 = vmatprep.subr.mxu0 0.0
      %896 = vmatpush1.msra.mxu0 0.0
      %897 = vmatprep.subr.mxu0 0.0
      %898 = vmatpush1.msra.mxu0 0.0
      %899 = vmatprep.subr.mxu0 0.0
      %900 = vmatpush1.msra.mxu0 0.0
      %901 = vmatprep.subr.mxu0 0.0
      %902 = vmatpush1.msra.mxu0 0.0
      %903 = vmatprep.subr.mxu0 0.0
      %904 = vmatpush1.msra.mxu0 0.0
      %905 = vmatprep.subr.mxu0 0.0
      %906 = vmatpush1.msra.mxu0 0.0
      %907 = vmatprep.subr.mxu0 0.0
      %908 = vmatpush1.msra.mxu0 0.0
      %909 = vmatprep.subr.mxu0 0.0
      %910 = vmatpush1.msra.mxu0 0.0
      %911 = vmatprep.subr.mxu0 0.0
      %912 = vmatpush1.msra.mxu0 0.0
      %913 = vmatprep.subr.mxu0 0.0
      %914 = vmatpush1.msra.mxu0 0.0
      %915 = vmatprep.subr.mxu0 0.0
      %916 = vmatpush1.msra.mxu0 0.0
      %917 = vmatprep.subr.mxu0 0.0
      %918 = vmatpush1.msra.mxu0 0.0
      %919 = vmatprep.subr.mxu0 0.0
      %920 = vmatpush1.msra.mxu0 0.0
      %921 = vmatprep.subr.mxu0 0.0
      %922 = vmatpush1.msra.mxu0 0.0
      %923 = vmatprep.mubr.f32.mxu0 %v786
      %924 = vmatmul.mubr.f32.gmra.mrb[0].mxu0 %v776
      %v925 = vpop.f32.mrb[0].mxu0
      %v926 = vadd.f32 %v782, %v925
      %v927 = vpop.f32.mrb[0].mxu0
      %v928 = vadd.f32 %v782, %v927
      %929 = vdwg.mxu0
      %v930 = vmax.f32 %v855, 0.0
      %v931 = vmax.f32 %v857, 0.0
      %v932 = vmax.f32 %v926, 0.0
      %v933 = vmax.f32 %v928, 0.0
      %934 = vrot.lane.b32.xlu0 %v930, 113
      %v935 = vpop.permute.xlu0 %934
      %936 = vrot.lane.b32.xlu0 %v931, 113
      %v937 = vpop.permute.xlu0 %936
      %938 = vrot.lane.b32.xlu0 %v932, 113
      %v939 = vpop.permute.xlu0 %938
      %940 = vrot.lane.b32.xlu0 %v933, 113
      %v941 = vpop.permute.xlu0 %940
      %v942 = vsel %vm443, %v939, %v941
      %v943 = vsel %vm443, %v937, %v939
      %v944 = vsel %vm443, %v935, %v937
      %v945 = vsel %vm443, %v941, %v935
      %946 = vrot.lane.b32.xlu0 %v930, 1
      %v947 = vpop.permute.xlu0 %946
      %948 = vrot.lane.b32.xlu0 %v931, 1
      %v949 = vpop.permute.xlu0 %948
      %950 = vrot.lane.b32.xlu0 %v932, 1
      %v951 = vpop.permute.xlu0 %950
      %952 = vrot.lane.b32.xlu0 %v933, 1
      %v953 = vpop.permute.xlu0 %952
      %v954 = vsel %vm468, %v951, %v953
      %v955 = vsel %vm468, %v949, %v951
      %v956 = vsel %vm468, %v947, %v949
      %v957 = vsel %vm468, %v953, %v947
      %v958 = vsel %vm481, %v944, %v957
      %v959 = vsel %vm482, %v943, %v956
      %v960 = vsel %vm483, %v942, %v955
      %v961 = vsel %vm484, %v945, %v954
      %962 = vrot.lane.b32.xlu0 %v930, 15
      %v963 = vpop.permute.xlu0 %962
      %964 = vrot.lane.b32.xlu0 %v931, 15
      %v965 = vpop.permute.xlu0 %964
      %966 = vrot.lane.b32.xlu0 %v932, 15
      %v967 = vpop.permute.xlu0 %966
      %968 = vrot.lane.b32.xlu0 %v933, 15
      %v969 = vpop.permute.xlu0 %968
      %v970 = vsel %vm509, %v967, %v969
      %v971 = vsel %vm509, %v965, %v967
      %v972 = vsel %vm509, %v963, %v965
      %v973 = vsel %vm509, %v969, %v963
      %974 = vrot.lane.b32.xlu0 %v930, 127
      %v975 = vpop.permute.xlu0 %974
      %976 = vrot.lane.b32.xlu0 %v931, 127
      %v977 = vpop.permute.xlu0 %976
      %978 = vrot.lane.b32.xlu0 %v932, 127
      %v979 = vpop.permute.xlu0 %978
      %980 = vrot.lane.b32.xlu0 %v933, 127
      %v981 = vpop.permute.xlu0 %980
      %v982 = vsel %vm534, %v979, %v981
      %v983 = vsel %vm534, %v977, %v979
      %v984 = vsel %vm534, %v975, %v977
      %v985 = vsel %vm534, %v981, %v975
      %v986 = vsel %vm547, %v973, %v984
      %v987 = vsel %vm548, %v972, %v983
      %v988 = vsel %vm549, %v971, %v982
      %v989 = vsel %vm550, %v970, %v985
      %vm990 = vcmp.lt.s32.totalorder %v359, 32
      %vm991 = vcmp.lt.s32.totalorder %v360, 32
      %vm992 = vcmp.lt.s32.totalorder %v361, 32
      %vm993 = vcmp.lt.s32.totalorder %v362, 32
      %vm994 = vcmp.ge.s32.totalorder %v359, 480
      %vm995 = vcmp.ge.s32.totalorder %v360, 480
      %vm996 = vcmp.ge.s32.totalorder %v361, 480
      %vm997 = vcmp.ge.s32.totalorder %v362, 480
      %998 = vrot.lane.b32.xlu0 %v958, 32
      %v999 = vpop.permute.xlu0 %998
      %1000 = vrot.lane.b32.xlu0 %v959, 32
      %v1001 = vpop.permute.xlu0 %1000
      %1002 = vrot.lane.b32.xlu0 %v960, 32
      %v1003 = vpop.permute.xlu0 %1002
      %1004 = vrot.lane.b32.xlu0 %v961, 32
      %v1005 = vpop.permute.xlu0 %1004
      %v1006 = vsel %vm990, %v1003, %v1005
      %v1007 = vsel %vm990, %v1001, %v1003
      %v1008 = vsel %vm990, %v999, %v1001
      %v1009 = vsel %vm990, %v1005, %v999
      %v1010 = vsel %vm990, 1, 0
      %v1011 = vsel %vm991, 1, 0
      %v1012 = vsel %vm992, 1, 0
      %v1013 = vsel %vm993, 1, 0
      %vm1014 = vcmp.eq.s32.totalorder %v1010, 1
      %vm1015 = vcmp.eq.s32.totalorder %v1011, 1
      %vm1016 = vcmp.eq.s32.totalorder %v1012, 1
      %vm1017 = vcmp.eq.s32.totalorder %v1013, 1
      %v1018 = vsel %vm1014, 0.0, %v1009
      %v1019 = vsel %vm1015, 0.0, %v1008
      %v1020 = vsel %vm1016, 0.0, %v1007
      %v1021 = vsel %vm1017, 0.0, %v1006
      %1022 = vrot.lane.b32.xlu0 %v930, 32
      %v1023 = vpop.permute.xlu0 %1022
      %1024 = vrot.lane.b32.xlu0 %v931, 32
      %v1025 = vpop.permute.xlu0 %1024
      %1026 = vrot.lane.b32.xlu0 %v932, 32
      %v1027 = vpop.permute.xlu0 %1026
      %1028 = vrot.lane.b32.xlu0 %v933, 32
      %v1029 = vpop.permute.xlu0 %1028
      %v1030 = vsel %vm990, %v1027, %v1029
      %v1031 = vsel %vm990, %v1025, %v1027
      %v1032 = vsel %vm990, %v1023, %v1025
      %v1033 = vsel %vm990, %v1029, %v1023
      %v1034 = vsel %vm1014, 0.0, %v1033
      %v1035 = vsel %vm1015, 0.0, %v1032
      %v1036 = vsel %vm1016, 0.0, %v1031
      %v1037 = vsel %vm1017, 0.0, %v1030
      %1038 = vrot.lane.b32.xlu0 %v986, 32
      %v1039 = vpop.permute.xlu0 %1038
      %1040 = vrot.lane.b32.xlu0 %v987, 32
      %v1041 = vpop.permute.xlu0 %1040
      %1042 = vrot.lane.b32.xlu0 %v988, 32
      %v1043 = vpop.permute.xlu0 %1042
      %1044 = vrot.lane.b32.xlu0 %v989, 32
      %v1045 = vpop.permute.xlu0 %1044
      %v1046 = vsel %vm990, %v1043, %v1045
      %v1047 = vsel %vm990, %v1041, %v1043
      %v1048 = vsel %vm990, %v1039, %v1041
      %v1049 = vsel %vm990, %v1045, %v1039
      %v1050 = vsel %vm1014, 0.0, %v1049
      %v1051 = vsel %vm1015, 0.0, %v1048
      %v1052 = vsel %vm1016, 0.0, %v1047
      %v1053 = vsel %vm1017, 0.0, %v1046
      %1054 = vrot.lane.b32.xlu0 %v958, 96
      %v1055 = vpop.permute.xlu0 %1054
      %1056 = vrot.lane.b32.xlu0 %v959, 96
      %v1057 = vpop.permute.xlu0 %1056
      %1058 = vrot.lane.b32.xlu0 %v960, 96
      %v1059 = vpop.permute.xlu0 %1058
      %1060 = vrot.lane.b32.xlu0 %v961, 96
      %v1061 = vpop.permute.xlu0 %1060
      %vm1062 = vcmp.lt.s32.totalorder %v359, 96
      %v1063 = vsel %vm1062, %v1059, %v1061
      %v1064 = vsel %vm1062, %v1057, %v1059
      %v1065 = vsel %vm1062, %v1055, %v1057
      %v1066 = vsel %vm1062, %v1061, %v1055
      %v1067 = vsel %vm994, 1, 0
      %v1068 = vsel %vm995, 1, 0
      %v1069 = vsel %vm996, 1, 0
      %v1070 = vsel %vm997, 1, 0
      %vm1071 = vcmp.eq.s32.totalorder %v1067, 1
      %vm1072 = vcmp.eq.s32.totalorder %v1068, 1
      %vm1073 = vcmp.eq.s32.totalorder %v1069, 1
      %vm1074 = vcmp.eq.s32.totalorder %v1070, 1
      %v1075 = vsel %vm1071, 0.0, %v1065
      %v1076 = vsel %vm1072, 0.0, %v1064
      %v1077 = vsel %vm1073, 0.0, %v1063
      %v1078 = vsel %vm1074, 0.0, %v1066
      %1079 = vrot.lane.b32.xlu0 %v930, 96
      %v1080 = vpop.permute.xlu0 %1079
      %1081 = vrot.lane.b32.xlu0 %v931, 96
      %v1082 = vpop.permute.xlu0 %1081
      %1083 = vrot.lane.b32.xlu0 %v932, 96
      %v1084 = vpop.permute.xlu0 %1083
      %1085 = vrot.lane.b32.xlu0 %v933, 96
      %v1086 = vpop.permute.xlu0 %1085
      %v1087 = vsel %vm1062, %v1084, %v1086
      %v1088 = vsel %vm1062, %v1082, %v1084
      %v1089 = vsel %vm1062, %v1080, %v1082
      %v1090 = vsel %vm1062, %v1086, %v1080
      %v1091 = vsel %vm1071, 0.0, %v1089
      %v1092 = vsel %vm1072, 0.0, %v1088
      %v1093 = vsel %vm1073, 0.0, %v1087
      %v1094 = vsel %vm1074, 0.0, %v1090
      %1095 = vrot.lane.b32.xlu0 %v986, 96
      %v1096 = vpop.permute.xlu0 %1095
      %1097 = vrot.lane.b32.xlu0 %v987, 96
      %v1098 = vpop.permute.xlu0 %1097
      %1099 = vrot.lane.b32.xlu0 %v988, 96
      %v1100 = vpop.permute.xlu0 %1099
      %1101 = vrot.lane.b32.xlu0 %v989, 96
      %v1102 = vpop.permute.xlu0 %1101
      %v1103 = vsel %vm1062, %v1100, %v1102
      %v1104 = vsel %vm1062, %v1098, %v1100
      %v1105 = vsel %vm1062, %v1096, %v1098
      %v1106 = vsel %vm1062, %v1102, %v1096
      %v1107 = vsel %vm1071, 0.0, %v1105
      %v1108 = vsel %vm1072, 0.0, %v1104
      %v1109 = vsel %vm1073, 0.0, %v1103
      %v1110 = vsel %vm1074, 0.0, %v1106
      %v1111 = vld [vmem:[%s3] sm:$0xff]
      %v1112 = vld [vmem:[%s4] sm:$0xff]
      %1114 = vset.pattern.permute.xlu0 0
      %1115 = vperm.xlu0 %1114, %v1112
      %v1116 = vpop.permute.xlu0 %1115
      %vm1118 = vcmask 588800
      %v1120 = vsel %vm1118, %v1111, 0
      %1122 = vmatprep.subr.mxu0 %v1019
      %1123 = vmatpush1.msra.mxu0 %v1018
      %1124 = vmatprep.subr.mxu0 %v1035
      %1125 = vmatpush1.msra.mxu0 %v1034
      %1126 = vmatprep.subr.mxu0 %v1051
      %1127 = vmatpush1.msra.mxu0 %v1050
      %1128 = vmatprep.subr.mxu0 %v959
      %1129 = vmatpush1.msra.mxu0 %v958
      %1130 = vmatprep.subr.mxu0 %v931
      %1131 = vmatpush1.msra.mxu0 %v930
      %1132 = vmatprep.subr.mxu0 %v987
      %1133 = vmatpush1.msra.mxu0 %v986
      %1134 = vmatprep.subr.mxu0 %v1076
      %1135 = vmatpush1.msra.mxu0 %v1075
      %1136 = vmatprep.subr.mxu0 %v1092
      %1137 = vmatpush1.msra.mxu0 %v1091
      %1138 = vmatprep.subr.mxu0 %v1108
      %1139 = vmatpush1.msra.mxu0 %v1107
      %1140 = vmatprep.subr.mxu0 0.0
      %1141 = vmatpush1.msra.mxu0 0.0
      %1142 = vmatprep.subr.mxu0 0.0
      %1143 = vmatpush1.msra.mxu0 0.0
      %1144 = vmatprep.subr.mxu0 0.0
      %1145 = vmatpush1.msra.mxu0 0.0
      %1146 = vmatprep.subr.mxu0 0.0
      %1147 = vmatpush1.msra.mxu0 0.0
      %1148 = vmatprep.subr.mxu0 0.0
      %1149 = vmatpush1.msra.mxu0 0.0
      %1150 = vmatprep.subr.mxu0 0.0
      %1151 = vmatpush1.msra.mxu0 0.0
      %1152 = vmatprep.subr.mxu0 0.0
      %1153 = vmatpush1.msra.mxu0 0.0
      %1154 = vmatprep.subr.mxu0 0.0
      %1155 = vmatpush1.msra.mxu0 0.0
      %1156 = vmatprep.subr.mxu0 0.0
      %1157 = vmatpush1.msra.mxu0 0.0
      %1158 = vmatprep.subr.mxu0 0.0
      %1159 = vmatpush1.msra.mxu0 0.0
      %1160 = vmatprep.subr.mxu0 0.0
      %1161 = vmatpush1.msra.mxu0 0.0
      %1162 = vmatprep.subr.mxu0 0.0
      %1163 = vmatpush1.msra.mxu0 0.0
      %1164 = vmatprep.subr.mxu0 0.0
      %1165 = vmatpush1.msra.mxu0 0.0
      %1166 = vmatprep.subr.mxu0 0.0
      %1167 = vmatpush1.msra.mxu0 0.0
      %1168 = vmatprep.subr.mxu0 0.0
      %1169 = vmatpush1.msra.mxu0 0.0
      %1170 = vmatprep.subr.mxu0 0.0
      %1171 = vmatpush1.msra.mxu0 0.0
      %1172 = vmatprep.subr.mxu0 0.0
      %1173 = vmatpush1.msra.mxu0 0.0
      %1174 = vmatprep.subr.mxu0 0.0
      %1175 = vmatpush1.msra.mxu0 0.0
      %1176 = vmatprep.subr.mxu0 0.0
      %1177 = vmatpush1.msra.mxu0 0.0
      %1178 = vmatprep.subr.mxu0 0.0
      %1179 = vmatpush1.msra.mxu0 0.0
      %1180 = vmatprep.subr.mxu0 0.0
      %1181 = vmatpush1.msra.mxu0 0.0
      %1182 = vmatprep.subr.mxu0 0.0
      %1183 = vmatpush1.msra.mxu0 0.0
      %1184 = vmatprep.subr.mxu0 0.0
      %1185 = vmatpush1.msra.mxu0 0.0
      %1186 = vmatprep.mubr.f32.mxu0 0.0
      %1187 = vmatmul.mubr.f32.gmra.mrb[0].mxu0 %v1120
      %v1188 = vpop.f32.mrb[0].mxu0
      %v1189 = vadd.f32 %v1116, %v1188
      %v1190 = vpop.f32.mrb[0].mxu0
      %v1191 = vadd.f32 %v1116, %v1190
      %1192 = vdwg.mxu0
      %1193 = vmatprep.subr.mxu0 %v1021
      %1194 = vmatpush1.msra.mxu0 %v1020
      %1195 = vmatprep.subr.mxu0 %v1037
      %1196 = vmatpush1.msra.mxu0 %v1036
      %1197 = vmatprep.subr.mxu0 %v1053
      %1198 = vmatpush1.msra.mxu0 %v1052
      %1199 = vmatprep.subr.mxu0 %v961
      %1200 = vmatpush1.msra.mxu0 %v960
      %1201 = vmatprep.subr.mxu0 %v933
      %1202 = vmatpush1.msra.mxu0 %v932
      %1203 = vmatprep.subr.mxu0 %v989
      %1204 = vmatpush1.msra.mxu0 %v988
      %1205 = vmatprep.subr.mxu0 %v1078
      %1206 = vmatpush1.msra.mxu0 %v1077
      %1207 = vmatprep.subr.mxu0 %v1094
      %1208 = vmatpush1.msra.mxu0 %v1093
      %1209 = vmatprep.subr.mxu0 %v1110
      %1210 = vmatpush1.msra.mxu0 %v1109
      %1211 = vmatprep.subr.mxu0 0.0
      %1212 = vmatpush1.msra.mxu0 0.0
      %1213 = vmatprep.subr.mxu0 0.0
      %1214 = vmatpush1.msra.mxu0 0.0
      %1215 = vmatprep.subr.mxu0 0.0
      %1216 = vmatpush1.msra.mxu0 0.0
      %1217 = vmatprep.subr.mxu0 0.0
      %1218 = vmatpush1.msra.mxu0 0.0
      %1219 = vmatprep.subr.mxu0 0.0
      %1220 = vmatpush1.msra.mxu0 0.0
      %1221 = vmatprep.subr.mxu0 0.0
      %1222 = vmatpush1.msra.mxu0 0.0
      %1223 = vmatprep.subr.mxu0 0.0
      %1224 = vmatpush1.msra.mxu0 0.0
      %1225 = vmatprep.subr.mxu0 0.0
      %1226 = vmatpush1.msra.mxu0 0.0
      %1227 = vmatprep.subr.mxu0 0.0
      %1228 = vmatpush1.msra.mxu0 0.0
      %1229 = vmatprep.subr.mxu0 0.0
      %1230 = vmatpush1.msra.mxu0 0.0
      %1231 = vmatprep.subr.mxu0 0.0
      %1232 = vmatpush1.msra.mxu0 0.0
      %1233 = vmatprep.subr.mxu0 0.0
      %1234 = vmatpush1.msra.mxu0 0.0
      %1235 = vmatprep.subr.mxu0 0.0
      %1236 = vmatpush1.msra.mxu0 0.0
      %1237 = vmatprep.subr.mxu0 0.0
      %1238 = vmatpush1.msra.mxu0 0.0
      %1239 = vmatprep.subr.mxu0 0.0
      %1240 = vmatpush1.msra.mxu0 0.0
      %1241 = vmatprep.subr.mxu0 0.0
      %1242 = vmatpush1.msra.mxu0 0.0
      %1243 = vmatprep.subr.mxu0 0.0
      %1244 = vmatpush1.msra.mxu0 0.0
      %1245 = vmatprep.subr.mxu0 0.0
      %1246 = vmatpush1.msra.mxu0 0.0
      %1247 = vmatprep.subr.mxu0 0.0
      %1248 = vmatpush1.msra.mxu0 0.0
      %1249 = vmatprep.subr.mxu0 0.0
      %1250 = vmatpush1.msra.mxu0 0.0
      %1251 = vmatprep.subr.mxu0 0.0
      %1252 = vmatpush1.msra.mxu0 0.0
      %1253 = vmatprep.subr.mxu0 0.0
      %1254 = vmatpush1.msra.mxu0 0.0
      %1255 = vmatprep.subr.mxu0 0.0
      %1256 = vmatpush1.msra.mxu0 0.0
      %1257 = vmatprep.mubr.f32.mxu0 0.0
      %1258 = vmatmul.mubr.f32.gmra.mrb[0].mxu0 %v1120
      %v1259 = vpop.f32.mrb[0].mxu0
      %v1260 = vadd.f32 %v1116, %v1259
      %v1261 = vpop.f32.mrb[0].mxu0
      %v1262 = vadd.f32 %v1116, %v1261
      %1263 = vdwg.mxu0
      %v1264 = vmax.f32 %v1189, 0.0
      %v1265 = vmax.f32 %v1191, 0.0
      %v1266 = vmax.f32 %v1260, 0.0
      %v1267 = vmax.f32 %v1262, 0.0
      %1268 = vrot.lane.b32.xlu0 %v1264, 113
      %v1269 = vpop.permute.xlu0 %1268
      %1270 = vrot.lane.b32.xlu0 %v1265, 113
      %v1271 = vpop.permute.xlu0 %1270
      %1272 = vrot.lane.b32.xlu0 %v1266, 113
      %v1273 = vpop.permute.xlu0 %1272
      %1274 = vrot.lane.b32.xlu0 %v1267, 113
      %v1275 = vpop.permute.xlu0 %1274
      %v1276 = vsel %vm443, %v1273, %v1275
      %v1277 = vsel %vm443, %v1271, %v1273
      %v1278 = vsel %vm443, %v1269, %v1271
      %v1279 = vsel %vm443, %v1275, %v1269
      %1280 = vrot.lane.b32.xlu0 %v1264, 1
      %v1281 = vpop.permute.xlu0 %1280
      %1282 = vrot.lane.b32.xlu0 %v1265, 1
      %v1283 = vpop.permute.xlu0 %1282
      %1284 = vrot.lane.b32.xlu0 %v1266, 1
      %v1285 = vpop.permute.xlu0 %1284
      %1286 = vrot.lane.b32.xlu0 %v1267, 1
      %v1287 = vpop.permute.xlu0 %1286
      %v1288 = vsel %vm468, %v1285, %v1287
      %v1289 = vsel %vm468, %v1283, %v1285
      %v1290 = vsel %vm468, %v1281, %v1283
      %v1291 = vsel %vm468, %v1287, %v1281
      %v1292 = vsel %vm481, %v1278, %v1291
      %v1293 = vsel %vm482, %v1277, %v1290
      %v1294 = vsel %vm483, %v1276, %v1289
      %v1295 = vsel %vm484, %v1279, %v1288
      %1296 = vrot.lane.b32.xlu0 %v1264, 15
      %v1297 = vpop.permute.xlu0 %1296
      %1298 = vrot.lane.b32.xlu0 %v1265, 15
      %v1299 = vpop.permute.xlu0 %1298
      %1300 = vrot.lane.b32.xlu0 %v1266, 15
      %v1301 = vpop.permute.xlu0 %1300
      %1302 = vrot.lane.b32.xlu0 %v1267, 15
      %v1303 = vpop.permute.xlu0 %1302
      %v1304 = vsel %vm509, %v1301, %v1303
      %v1305 = vsel %vm509, %v1299, %v1301
      %v1306 = vsel %vm509, %v1297, %v1299
      %v1307 = vsel %vm509, %v1303, %v1297
      %1308 = vrot.lane.b32.xlu0 %v1264, 127
      %v1309 = vpop.permute.xlu0 %1308
      %1310 = vrot.lane.b32.xlu0 %v1265, 127
      %v1311 = vpop.permute.xlu0 %1310
      %1312 = vrot.lane.b32.xlu0 %v1266, 127
      %v1313 = vpop.permute.xlu0 %1312
      %1314 = vrot.lane.b32.xlu0 %v1267, 127
      %v1315 = vpop.permute.xlu0 %1314
      %v1316 = vsel %vm534, %v1313, %v1315
      %v1317 = vsel %vm534, %v1311, %v1313
      %v1318 = vsel %vm534, %v1309, %v1311
      %v1319 = vsel %vm534, %v1315, %v1309
      %v1320 = vsel %vm547, %v1307, %v1318
      %v1321 = vsel %vm548, %v1306, %v1317
      %v1322 = vsel %vm549, %v1305, %v1316
      %v1323 = vsel %vm550, %v1304, %v1319
      %vm1324 = vcmp.lt.s32.totalorder %v359, 64
      %vm1325 = vcmp.lt.s32.totalorder %v360, 64
      %vm1326 = vcmp.lt.s32.totalorder %v361, 64
      %vm1327 = vcmp.lt.s32.totalorder %v362, 64
      %vm1328 = vcmp.ge.s32.totalorder %v359, 448
      %vm1329 = vcmp.ge.s32.totalorder %v360, 448
      %vm1330 = vcmp.ge.s32.totalorder %v361, 448
      %vm1331 = vcmp.ge.s32.totalorder %v362, 448
      %1332 = vrot.lane.b32.xlu0 %v1292, 64
      %v1333 = vpop.permute.xlu0 %1332
      %1334 = vrot.lane.b32.xlu0 %v1293, 64
      %v1335 = vpop.permute.xlu0 %1334
      %1336 = vrot.lane.b32.xlu0 %v1294, 64
      %v1337 = vpop.permute.xlu0 %1336
      %1338 = vrot.lane.b32.xlu0 %v1295, 64
      %v1339 = vpop.permute.xlu0 %1338
      %v1340 = vsel %vm1324, %v1337, %v1339
      %v1341 = vsel %vm1324, %v1335, %v1337
      %v1342 = vsel %vm1324, %v1333, %v1335
      %v1343 = vsel %vm1324, %v1339, %v1333
      %v1344 = vsel %vm1324, 1, 0
      %v1345 = vsel %vm1325, 1, 0
      %v1346 = vsel %vm1326, 1, 0
      %v1347 = vsel %vm1327, 1, 0
      %vm1348 = vcmp.eq.s32.totalorder %v1344, 1
      %vm1349 = vcmp.eq.s32.totalorder %v1345, 1
      %vm1350 = vcmp.eq.s32.totalorder %v1346, 1
      %vm1351 = vcmp.eq.s32.totalorder %v1347, 1
      %v1352 = vsel %vm1348, 0.0, %v1343
      %v1353 = vsel %vm1349, 0.0, %v1342
      %v1354 = vsel %vm1350, 0.0, %v1341
      %v1355 = vsel %vm1351, 0.0, %v1340
      %1356 = vrot.lane.b32.xlu0 %v1264, 64
      %v1357 = vpop.permute.xlu0 %1356
      %1358 = vrot.lane.b32.xlu0 %v1265, 64
      %v1359 = vpop.permute.xlu0 %1358
      %1360 = vrot.lane.b32.xlu0 %v1266, 64
      %v1361 = vpop.permute.xlu0 %1360
      %1362 = vrot.lane.b32.xlu0 %v1267, 64
      %v1363 = vpop.permute.xlu0 %1362
      %v1364 = vsel %vm1324, %v1361, %v1363
      %v1365 = vsel %vm1324, %v1359, %v1361
      %v1366 = vsel %vm1324, %v1357, %v1359
      %v1367 = vsel %vm1324, %v1363, %v1357
      %v1368 = vsel %vm1348, 0.0, %v1367
      %v1369 = vsel %vm1349, 0.0, %v1366
      %v1370 = vsel %vm1350, 0.0, %v1365
      %v1371 = vsel %vm1351, 0.0, %v1364
      %1372 = vrot.lane.b32.xlu0 %v1320, 64
      %v1373 = vpop.permute.xlu0 %1372
      %1374 = vrot.lane.b32.xlu0 %v1321, 64
      %v1375 = vpop.permute.xlu0 %1374
      %1376 = vrot.lane.b32.xlu0 %v1322, 64
      %v1377 = vpop.permute.xlu0 %1376
      %1378 = vrot.lane.b32.xlu0 %v1323, 64
      %v1379 = vpop.permute.xlu0 %1378
      %v1380 = vsel %vm1324, %v1377, %v1379
      %v1381 = vsel %vm1324, %v1375, %v1377
      %v1382 = vsel %vm1324, %v1373, %v1375
      %v1383 = vsel %vm1324, %v1379, %v1373
      %v1384 = vsel %vm1348, 0.0, %v1383
      %v1385 = vsel %vm1349, 0.0, %v1382
      %v1386 = vsel %vm1350, 0.0, %v1381
      %v1387 = vsel %vm1351, 0.0, %v1380
      %v1388 = vsel %vm1328, 1, 0
      %v1389 = vsel %vm1329, 1, 0
      %v1390 = vsel %vm1330, 1, 0
      %v1391 = vsel %vm1331, 1, 0
      %vm1392 = vcmp.eq.s32.totalorder %v1388, 1
      %vm1393 = vcmp.eq.s32.totalorder %v1389, 1
      %vm1394 = vcmp.eq.s32.totalorder %v1390, 1
      %vm1395 = vcmp.eq.s32.totalorder %v1391, 1
      %v1396 = vsel %vm1392, 0.0, %v1342
      %v1397 = vsel %vm1393, 0.0, %v1341
      %v1398 = vsel %vm1394, 0.0, %v1340
      %v1399 = vsel %vm1395, 0.0, %v1343
      %v1400 = vsel %vm1392, 0.0, %v1366
      %v1401 = vsel %vm1393, 0.0, %v1365
      %v1402 = vsel %vm1394, 0.0, %v1364
      %v1403 = vsel %vm1395, 0.0, %v1367
      %v1404 = vsel %vm1392, 0.0, %v1382
      %v1405 = vsel %vm1393, 0.0, %v1381
      %v1406 = vsel %vm1394, 0.0, %v1380
      %v1407 = vsel %vm1395, 0.0, %v1383
      %v1408 = vld [vmem:[%s5] sm:$0xf]
      %v1409 = vld [vmem:[%s6] sm:$0xf]
      %1411 = vset.pattern.permute.xlu0 0
      %1412 = vperm.xlu0 %1411, %v1409
      %v1413 = vpop.permute.xlu0 %1412
      %v1416 = vsel %vm1118, %v1408, 0
      %1418 = vmatprep.subr.mxu0 %v1353
      %1419 = vmatpush1.msra.mxu0 %v1352
      %1420 = vmatprep.subr.mxu0 %v1369
      %1421 = vmatpush1.msra.mxu0 %v1368
      %1422 = vmatprep.subr.mxu0 %v1385
      %1423 = vmatpush1.msra.mxu0 %v1384
      %1424 = vmatprep.subr.mxu0 %v1293
      %1425 = vmatpush1.msra.mxu0 %v1292
      %1426 = vmatprep.subr.mxu0 %v1265
      %1427 = vmatpush1.msra.mxu0 %v1264
      %1428 = vmatprep.subr.mxu0 %v1321
      %1429 = vmatpush1.msra.mxu0 %v1320
      %1430 = vmatprep.subr.mxu0 %v1397
      %1431 = vmatpush1.msra.mxu0 %v1396
      %1432 = vmatprep.subr.mxu0 %v1401
      %1433 = vmatpush1.msra.mxu0 %v1400
      %1434 = vmatprep.subr.mxu0 %v1405
      %1435 = vmatpush1.msra.mxu0 %v1404
      %1436 = vmatprep.subr.mxu0 0.0
      %1437 = vmatpush1.msra.mxu0 0.0
      %1438 = vmatprep.subr.mxu0 0.0
      %1439 = vmatpush1.msra.mxu0 0.0
      %1440 = vmatprep.subr.mxu0 0.0
      %1441 = vmatpush1.msra.mxu0 0.0
      %1442 = vmatprep.subr.mxu0 0.0
      %1443 = vmatpush1.msra.mxu0 0.0
      %1444 = vmatprep.subr.mxu0 0.0
      %1445 = vmatpush1.msra.mxu0 0.0
      %1446 = vmatprep.subr.mxu0 0.0
      %1447 = vmatpush1.msra.mxu0 0.0
      %1448 = vmatprep.subr.mxu0 0.0
      %1449 = vmatpush1.msra.mxu0 0.0
      %1450 = vmatprep.subr.mxu0 0.0
      %1451 = vmatpush1.msra.mxu0 0.0
      %1452 = vmatprep.subr.mxu0 0.0
      %1453 = vmatpush1.msra.mxu0 0.0
      %1454 = vmatprep.subr.mxu0 0.0
      %1455 = vmatpush1.msra.mxu0 0.0
      %1456 = vmatprep.subr.mxu0 0.0
      %1457 = vmatpush1.msra.mxu0 0.0
      %1458 = vmatprep.subr.mxu0 0.0
      %1459 = vmatpush1.msra.mxu0 0.0
      %1460 = vmatprep.subr.mxu0 0.0
      %1461 = vmatpush1.msra.mxu0 0.0
      %1462 = vmatprep.subr.mxu0 0.0
      %1463 = vmatpush1.msra.mxu0 0.0
      %1464 = vmatprep.subr.mxu0 0.0
      %1465 = vmatpush1.msra.mxu0 0.0
      %1466 = vmatprep.subr.mxu0 0.0
      %1467 = vmatpush1.msra.mxu0 0.0
      %1468 = vmatprep.subr.mxu0 0.0
      %1469 = vmatpush1.msra.mxu0 0.0
      %1470 = vmatprep.subr.mxu0 0.0
      %1471 = vmatpush1.msra.mxu0 0.0
      %1472 = vmatprep.subr.mxu0 0.0
      %1473 = vmatpush1.msra.mxu0 0.0
      %1474 = vmatprep.subr.mxu0 0.0
      %1475 = vmatpush1.msra.mxu0 0.0
      %1476 = vmatprep.subr.mxu0 0.0
      %1477 = vmatpush1.msra.mxu0 0.0
      %1478 = vmatprep.subr.mxu0 0.0
      %1479 = vmatpush1.msra.mxu0 0.0
      %1480 = vmatprep.subr.mxu0 0.0
      %1481 = vmatpush1.msra.mxu0 0.0
      %1482 = vmatprep.mubr.f32.mxu0 0.0
      %1483 = vmatmul.mubr.f32.gmra.mrb[0].mxu0 %v1416
      %v1484 = vpop.f32.mrb[0].mxu0
      %v1485 = vadd.f32 %v1413, %v1484
      %v1486 = vpop.f32.mrb[0].mxu0
      %v1487 = vadd.f32 %v1413, %v1486
      %1488 = vdwg.mxu0
      %1489 = vmatprep.subr.mxu0 %v1355
      %1490 = vmatpush1.msra.mxu0 %v1354
      %1491 = vmatprep.subr.mxu0 %v1371
      %1492 = vmatpush1.msra.mxu0 %v1370
      %1493 = vmatprep.subr.mxu0 %v1387
      %1494 = vmatpush1.msra.mxu0 %v1386
      %1495 = vmatprep.subr.mxu0 %v1295
      %1496 = vmatpush1.msra.mxu0 %v1294
      %1497 = vmatprep.subr.mxu0 %v1267
      %1498 = vmatpush1.msra.mxu0 %v1266
      %1499 = vmatprep.subr.mxu0 %v1323
      %1500 = vmatpush1.msra.mxu0 %v1322
      %1501 = vmatprep.subr.mxu0 %v1399
      %1502 = vmatpush1.msra.mxu0 %v1398
      %1503 = vmatprep.subr.mxu0 %v1403
      %1504 = vmatpush1.msra.mxu0 %v1402
      %1505 = vmatprep.subr.mxu0 %v1407
      %1506 = vmatpush1.msra.mxu0 %v1406
      %1507 = vmatprep.subr.mxu0 0.0
      %1508 = vmatpush1.msra.mxu0 0.0
      %1509 = vmatprep.subr.mxu0 0.0
      %1510 = vmatpush1.msra.mxu0 0.0
      %1511 = vmatprep.subr.mxu0 0.0
      %1512 = vmatpush1.msra.mxu0 0.0
      %1513 = vmatprep.subr.mxu0 0.0
      %1514 = vmatpush1.msra.mxu0 0.0
      %1515 = vmatprep.subr.mxu0 0.0
      %1516 = vmatpush1.msra.mxu0 0.0
      %1517 = vmatprep.subr.mxu0 0.0
      %1518 = vmatpush1.msra.mxu0 0.0
      %1519 = vmatprep.subr.mxu0 0.0
      %1520 = vmatpush1.msra.mxu0 0.0
      %1521 = vmatprep.subr.mxu0 0.0
      %1522 = vmatpush1.msra.mxu0 0.0
      %1523 = vmatprep.subr.mxu0 0.0
      %1524 = vmatpush1.msra.mxu0 0.0
      %1525 = vmatprep.subr.mxu0 0.0
      %1526 = vmatpush1.msra.mxu0 0.0
      %1527 = vmatprep.subr.mxu0 0.0
      %1528 = vmatpush1.msra.mxu0 0.0
      %1529 = vmatprep.subr.mxu0 0.0
      %1530 = vmatpush1.msra.mxu0 0.0
      %1531 = vmatprep.subr.mxu0 0.0
      %1532 = vmatpush1.msra.mxu0 0.0
      %1533 = vmatprep.subr.mxu0 0.0
      %1534 = vmatpush1.msra.mxu0 0.0
      %1535 = vmatprep.subr.mxu0 0.0
      %1536 = vmatpush1.msra.mxu0 0.0
      %1537 = vmatprep.subr.mxu0 0.0
      %1538 = vmatpush1.msra.mxu0 0.0
      %1539 = vmatprep.subr.mxu0 0.0
      %1540 = vmatpush1.msra.mxu0 0.0
      %1541 = vmatprep.subr.mxu0 0.0
      %1542 = vmatpush1.msra.mxu0 0.0
      %1543 = vmatprep.subr.mxu0 0.0
      %1544 = vmatpush1.msra.mxu0 0.0
      %1545 = vmatprep.subr.mxu0 0.0
      %1546 = vmatpush1.msra.mxu0 0.0
      %1547 = vmatprep.subr.mxu0 0.0
      %1548 = vmatpush1.msra.mxu0 0.0
      %1549 = vmatprep.subr.mxu0 0.0
      %1550 = vmatpush1.msra.mxu0 0.0
      %1551 = vmatprep.subr.mxu0 0.0
      %1552 = vmatpush1.msra.mxu0 0.0
      %1553 = vmatprep.mubr.f32.mxu0 0.0
      %1554 = vmatmul.mubr.f32.gmra.mrb[0].mxu0 %v1416
      %v1555 = vpop.f32.mrb[0].mxu0
      %v1556 = vadd.f32 %v1413, %v1555
      %v1557 = vpop.f32.mrb[0].mxu0
      %v1558 = vadd.f32 %v1413, %v1557
      %1559 = vdwg.mxu0
      %v1560 = vmax.f32 %v1485, 0.0
      %v1561 = vmax.f32 %v1487, 0.0
      %v1562 = vmax.f32 %v1556, 0.0
      %v1563 = vmax.f32 %v1558, 0.0
      %1564 = vrot.lane.b32.xlu0 %v1560, 113
      %v1565 = vpop.permute.xlu0 %1564
      %1566 = vrot.lane.b32.xlu0 %v1561, 113
      %v1567 = vpop.permute.xlu0 %1566
      %1568 = vrot.lane.b32.xlu0 %v1562, 113
      %v1569 = vpop.permute.xlu0 %1568
      %1570 = vrot.lane.b32.xlu0 %v1563, 113
      %v1571 = vpop.permute.xlu0 %1570
      %v1572 = vsel %vm443, %v1569, %v1571
      %v1573 = vsel %vm443, %v1567, %v1569
      %v1574 = vsel %vm443, %v1565, %v1567
      %v1575 = vsel %vm443, %v1571, %v1565
      %1576 = vrot.lane.b32.xlu0 %v1560, 1
      %v1577 = vpop.permute.xlu0 %1576
      %1578 = vrot.lane.b32.xlu0 %v1561, 1
      %v1579 = vpop.permute.xlu0 %1578
      %1580 = vrot.lane.b32.xlu0 %v1562, 1
      %v1581 = vpop.permute.xlu0 %1580
      %1582 = vrot.lane.b32.xlu0 %v1563, 1
      %v1583 = vpop.permute.xlu0 %1582
      %v1584 = vsel %vm468, %v1581, %v1583
      %v1585 = vsel %vm468, %v1579, %v1581
      %v1586 = vsel %vm468, %v1577, %v1579
      %v1587 = vsel %vm468, %v1583, %v1577
      %v1588 = vsel %vm481, %v1574, %v1587
      %v1589 = vsel %vm482, %v1573, %v1586
      %v1590 = vsel %vm483, %v1572, %v1585
      %v1591 = vsel %vm484, %v1575, %v1584
      %1592 = vrot.lane.b32.xlu0 %v1560, 15
      %v1593 = vpop.permute.xlu0 %1592
      %1594 = vrot.lane.b32.xlu0 %v1561, 15
      %v1595 = vpop.permute.xlu0 %1594
      %1596 = vrot.lane.b32.xlu0 %v1562, 15
      %v1597 = vpop.permute.xlu0 %1596
      %1598 = vrot.lane.b32.xlu0 %v1563, 15
      %v1599 = vpop.permute.xlu0 %1598
      %v1600 = vsel %vm509, %v1597, %v1599
      %v1601 = vsel %vm509, %v1595, %v1597
      %v1602 = vsel %vm509, %v1593, %v1595
      %v1603 = vsel %vm509, %v1599, %v1593
      %1604 = vrot.lane.b32.xlu0 %v1560, 127
      %v1605 = vpop.permute.xlu0 %1604
      %1606 = vrot.lane.b32.xlu0 %v1561, 127
      %v1607 = vpop.permute.xlu0 %1606
      %1608 = vrot.lane.b32.xlu0 %v1562, 127
      %v1609 = vpop.permute.xlu0 %1608
      %1610 = vrot.lane.b32.xlu0 %v1563, 127
      %v1611 = vpop.permute.xlu0 %1610
      %v1612 = vsel %vm534, %v1609, %v1611
      %v1613 = vsel %vm534, %v1607, %v1609
      %v1614 = vsel %vm534, %v1605, %v1607
      %v1615 = vsel %vm534, %v1611, %v1605
      %v1616 = vsel %vm547, %v1603, %v1614
      %v1617 = vsel %vm548, %v1602, %v1613
      %v1618 = vsel %vm549, %v1601, %v1612
      %v1619 = vsel %vm550, %v1600, %v1615
      %vm1620 = vcmp.lt.s32.totalorder %v359, 128
      %vm1621 = vcmp.lt.s32.totalorder %v360, 128
      %vm1622 = vcmp.lt.s32.totalorder %v361, 128
      %vm1623 = vcmp.lt.s32.totalorder %v362, 128
      %vm1624 = vcmp.ge.s32.totalorder %v359, 384
      %vm1625 = vcmp.ge.s32.totalorder %v360, 384
      %vm1626 = vcmp.ge.s32.totalorder %v361, 384
      %vm1627 = vcmp.ge.s32.totalorder %v362, 384
      %v1628 = vsel %vm1620, 1, 0
      %v1629 = vsel %vm1621, 1, 0
      %v1630 = vsel %vm1622, 1, 0
      %v1631 = vsel %vm1623, 1, 0
      %vm1632 = vcmp.eq.s32.totalorder %v1628, 1
      %vm1633 = vcmp.eq.s32.totalorder %v1629, 1
      %vm1634 = vcmp.eq.s32.totalorder %v1630, 1
      %vm1635 = vcmp.eq.s32.totalorder %v1631, 1
      %v1636 = vsel %vm1632, 0.0, %v1591
      %v1637 = vsel %vm1633, 0.0, %v1588
      %v1638 = vsel %vm1634, 0.0, %v1589
      %v1639 = vsel %vm1635, 0.0, %v1590
      %v1640 = vsel %vm1632, 0.0, %v1563
      %v1641 = vsel %vm1633, 0.0, %v1560
      %v1642 = vsel %vm1634, 0.0, %v1561
      %v1643 = vsel %vm1635, 0.0, %v1562
      %v1644 = vsel %vm1632, 0.0, %v1619
      %v1645 = vsel %vm1633, 0.0, %v1616
      %v1646 = vsel %vm1634, 0.0, %v1617
      %v1647 = vsel %vm1635, 0.0, %v1618
      %v1648 = vsel %vm1624, 1, 0
      %v1649 = vsel %vm1625, 1, 0
      %v1650 = vsel %vm1626, 1, 0
      %v1651 = vsel %vm1627, 1, 0
      %vm1652 = vcmp.eq.s32.totalorder %v1648, 1
      %vm1653 = vcmp.eq.s32.totalorder %v1649, 1
      %vm1654 = vcmp.eq.s32.totalorder %v1650, 1
      %vm1655 = vcmp.eq.s32.totalorder %v1651, 1
      %v1656 = vsel %vm1652, 0.0, %v1589
      %v1657 = vsel %vm1653, 0.0, %v1590
      %v1658 = vsel %vm1654, 0.0, %v1591
      %v1659 = vsel %vm1655, 0.0, %v1588
      %v1660 = vsel %vm1652, 0.0, %v1561
      %v1661 = vsel %vm1653, 0.0, %v1562
      %v1662 = vsel %vm1654, 0.0, %v1563
      %v1663 = vsel %vm1655, 0.0, %v1560
      %v1664 = vsel %vm1652, 0.0, %v1617
      %v1665 = vsel %vm1653, 0.0, %v1618
      %v1666 = vsel %vm1654, 0.0, %v1619
      %v1667 = vsel %vm1655, 0.0, %v1616
      %v1672 = vrot.slane %v1640, 4
      %v1673 = vrot.slane %v1641, 4
      %v1674 = vrot.slane %v1642, 4
      %v1675 = vrot.slane %v1643, 4
      %v1684 = vrot.slane %v1588, 4
      %v1685 = vrot.slane %v1589, 4
      %v1686 = vrot.slane %v1590, 4
      %v1687 = vrot.slane %v1591, 4
      %v1696 = vrot.slane %v1616, 4
      %v1697 = vrot.slane %v1617, 4
      %v1698 = vrot.slane %v1618, 4
      %v1699 = vrot.slane %v1619, 4
      %v1708 = vrot.slane %v1660, 4
      %v1709 = vrot.slane %v1661, 4
      %v1710 = vrot.slane %v1662, 4
      %v1711 = vrot.slane %v1663, 4
      %vm1716 = vcmask 1043456
      %v1717 = vsel %vm1716, %v1636, %v1672
      %v1718 = vsel %vm1716, %v1637, %v1673
      %v1719 = vsel %vm1716, %v1638, %v1674
      %v1720 = vsel %vm1716, %v1639, %v1675
      %v1721 = vsel %vm1716, %v1644, %v1684
      %v1722 = vsel %vm1716, %v1645, %v1685
      %v1723 = vsel %vm1716, %v1646, %v1686
      %v1724 = vsel %vm1716, %v1647, %v1687
      %v1725 = vsel %vm1716, %v1560, %v1696
      %v1726 = vsel %vm1716, %v1561, %v1697
      %v1727 = vsel %vm1716, %v1562, %v1698
      %v1728 = vsel %vm1716, %v1563, %v1699
      %v1729 = vsel %vm1716, %v1656, %v1708
      %v1730 = vsel %vm1716, %v1657, %v1709
      %v1731 = vsel %vm1716, %v1658, %v1710
      %v1732 = vsel %vm1716, %v1659, %v1711
      %v1733 = vld [vmem:[%s7] sm:$0xff]
      %v1734 = vld [vmem:[%s8] sm:$0xff]
      %1736 = vset.pattern.permute.xlu0 0
      %1737 = vperm.xlu0 %1736, %v1734
      %v1738 = vpop.permute.xlu0 %1737
      %vm1740 = vcmask 293888
      %v1742 = vsel %vm1740, %v1733, 0
      %v1745 = vsel %vm1716, %v1664, 0
      %v1748 = vsel %vm1716, %v1665, 0
      %v1751 = vsel %vm1716, %v1666, 0
      %v1754 = vsel %vm1716, %v1667, 0
      %1756 = vmatprep.subr.mxu0 %v1718
      %1757 = vmatpush1.msra.mxu0 %v1717
      %1758 = vmatprep.subr.mxu0 %v1722
      %1759 = vmatpush1.msra.mxu0 %v1721
      %1760 = vmatprep.subr.mxu0 %v1726
      %1761 = vmatpush1.msra.mxu0 %v1725
      %1762 = vmatprep.subr.mxu0 %v1730
      %1763 = vmatpush1.msra.mxu0 %v1729
      %1764 = vmatprep.subr.mxu0 %v1748
      %1765 = vmatpush1.msra.mxu0 %v1745
      %1766 = vmatprep.subr.mxu0 0.0
      %1767 = vmatpush1.msra.mxu0 0.0
      %1768 = vmatprep.subr.mxu0 0.0
      %1769 = vmatpush1.msra.mxu0 0.0
      %1770 = vmatprep.subr.mxu0 0.0
      %1771 = vmatpush1.msra.mxu0 0.0
      %1772 = vmatprep.subr.mxu0 0.0
      %1773 = vmatpush1.msra.mxu0 0.0
      %1774 = vmatprep.subr.mxu0 0.0
      %1775 = vmatpush1.msra.mxu0 0.0
      %1776 = vmatprep.subr.mxu0 0.0
      %1777 = vmatpush1.msra.mxu0 0.0
      %1778 = vmatprep.subr.mxu0 0.0
      %1779 = vmatpush1.msra.mxu0 0.0
      %1780 = vmatprep.subr.mxu0 0.0
      %1781 = vmatpush1.msra.mxu0 0.0
      %1782 = vmatprep.subr.mxu0 0.0
      %1783 = vmatpush1.msra.mxu0 0.0
      %1784 = vmatprep.subr.mxu0 0.0
      %1785 = vmatpush1.msra.mxu0 0.0
      %1786 = vmatprep.subr.mxu0 0.0
      %1787 = vmatpush1.msra.mxu0 0.0
      %1788 = vmatprep.subr.mxu0 0.0
      %1789 = vmatpush1.msra.mxu0 0.0
      %1790 = vmatprep.subr.mxu0 0.0
      %1791 = vmatpush1.msra.mxu0 0.0
      %1792 = vmatprep.subr.mxu0 0.0
      %1793 = vmatpush1.msra.mxu0 0.0
      %1794 = vmatprep.subr.mxu0 0.0
      %1795 = vmatpush1.msra.mxu0 0.0
      %1796 = vmatprep.subr.mxu0 0.0
      %1797 = vmatpush1.msra.mxu0 0.0
      %1798 = vmatprep.subr.mxu0 0.0
      %1799 = vmatpush1.msra.mxu0 0.0
      %1800 = vmatprep.subr.mxu0 0.0
      %1801 = vmatpush1.msra.mxu0 0.0
      %1802 = vmatprep.subr.mxu0 0.0
      %1803 = vmatpush1.msra.mxu0 0.0
      %1804 = vmatprep.subr.mxu0 0.0
      %1805 = vmatpush1.msra.mxu0 0.0
      %1806 = vmatprep.subr.mxu0 0.0
      %1807 = vmatpush1.msra.mxu0 0.0
      %1808 = vmatprep.subr.mxu0 0.0
      %1809 = vmatpush1.msra.mxu0 0.0
      %1810 = vmatprep.subr.mxu0 0.0
      %1811 = vmatpush1.msra.mxu0 0.0
      %1812 = vmatprep.subr.mxu0 0.0
      %1813 = vmatpush1.msra.mxu0 0.0
      %1814 = vmatprep.subr.mxu0 0.0
      %1815 = vmatpush1.msra.mxu0 0.0
      %1816 = vmatprep.subr.mxu0 0.0
      %1817 = vmatpush1.msra.mxu0 0.0
      %1818 = vmatprep.subr.mxu0 0.0
      %1819 = vmatpush1.msra.mxu0 0.0
      %1820 = vmatprep.mubr.f32.mxu0 0.0
      %1821 = vmatmul.mubr.f32.gmra.mrb[0].mxu0 %v1742
      %v1822 = vpop.f32.mrb[0].mxu0
      %v1823 = vadd.f32 %v1738, %v1822
      %v1824 = vpop.f32.mrb[0].mxu0
      %v1825 = vadd.f32 %v1738, %v1824
      %1826 = vdwg.mxu0
      %1827 = vmatprep.subr.mxu0 %v1720
      %1828 = vmatpush1.msra.mxu0 %v1719
      %1829 = vmatprep.subr.mxu0 %v1724
      %1830 = vmatpush1.msra.mxu0 %v1723
      %1831 = vmatprep.subr.mxu0 %v1728
      %1832 = vmatpush1.msra.mxu0 %v1727
      %1833 = vmatprep.subr.mxu0 %v1732
      %1834 = vmatpush1.msra.mxu0 %v1731
      %1835 = vmatprep.subr.mxu0 %v1754
      %1836 = vmatpush1.msra.mxu0 %v1751
      %1837 = vmatprep.subr.mxu0 0.0
      %1838 = vmatpush1.msra.mxu0 0.0
      %1839 = vmatprep.subr.mxu0 0.0
      %1840 = vmatpush1.msra.mxu0 0.0
      %1841 = vmatprep.subr.mxu0 0.0
      %1842 = vmatpush1.msra.mxu0 0.0
      %1843 = vmatprep.subr.mxu0 0.0
      %1844 = vmatpush1.msra.mxu0 0.0
      %1845 = vmatprep.subr.mxu0 0.0
      %1846 = vmatpush1.msra.mxu0 0.0
      %1847 = vmatprep.subr.mxu0 0.0
      %1848 = vmatpush1.msra.mxu0 0.0
      %1849 = vmatprep.subr.mxu0 0.0
      %1850 = vmatpush1.msra.mxu0 0.0
      %1851 = vmatprep.subr.mxu0 0.0
      %1852 = vmatpush1.msra.mxu0 0.0
      %1853 = vmatprep.subr.mxu0 0.0
      %1854 = vmatpush1.msra.mxu0 0.0
      %1855 = vmatprep.subr.mxu0 0.0
      %1856 = vmatpush1.msra.mxu0 0.0
      %1857 = vmatprep.subr.mxu0 0.0
      %1858 = vmatpush1.msra.mxu0 0.0
      %1859 = vmatprep.subr.mxu0 0.0
      %1860 = vmatpush1.msra.mxu0 0.0
      %1861 = vmatprep.subr.mxu0 0.0
      %1862 = vmatpush1.msra.mxu0 0.0
      %1863 = vmatprep.subr.mxu0 0.0
      %1864 = vmatpush1.msra.mxu0 0.0
      %1865 = vmatprep.subr.mxu0 0.0
      %1866 = vmatpush1.msra.mxu0 0.0
      %1867 = vmatprep.subr.mxu0 0.0
      %1868 = vmatpush1.msra.mxu0 0.0
      %1869 = vmatprep.subr.mxu0 0.0
      %1870 = vmatpush1.msra.mxu0 0.0
      %1871 = vmatprep.subr.mxu0 0.0
      %1872 = vmatpush1.msra.mxu0 0.0
      %1873 = vmatprep.subr.mxu0 0.0
      %1874 = vmatpush1.msra.mxu0 0.0
      %1875 = vmatprep.subr.mxu0 0.0
      %1876 = vmatpush1.msra.mxu0 0.0
      %1877 = vmatprep.subr.mxu0 0.0
      %1878 = vmatpush1.msra.mxu0 0.0
      %1879 = vmatprep.subr.mxu0 0.0
      %1880 = vmatpush1.msra.mxu0 0.0
      %1881 = vmatprep.subr.mxu0 0.0
      %1882 = vmatpush1.msra.mxu0 0.0
      %1883 = vmatprep.subr.mxu0 0.0
      %1884 = vmatpush1.msra.mxu0 0.0
      %1885 = vmatprep.subr.mxu0 0.0
      %1886 = vmatpush1.msra.mxu0 0.0
      %1887 = vmatprep.subr.mxu0 0.0
      %1888 = vmatpush1.msra.mxu0 0.0
      %1889 = vmatprep.subr.mxu0 0.0
      %1890 = vmatpush1.msra.mxu0 0.0
      %1891 = vmatprep.mubr.f32.mxu0 0.0
      %1892 = vmatmul.mubr.f32.gmra.mrb[0].mxu0 %v1742
      %v1893 = vpop.f32.mrb[0].mxu0
      %v1894 = vadd.f32 %v1738, %v1893
      %v1895 = vpop.f32.mrb[0].mxu0
      %v1896 = vadd.f32 %v1738, %v1895
      %1897 = vdwg.mxu0
      %v1898 = vmax.f32 %v1823, 0.0
      %v1899 = vmax.f32 %v1825, 0.0
      %v1900 = vmax.f32 %v1894, 0.0
      %v1901 = vmax.f32 %v1896, 0.0
      %v1902 = vld [vmem:[%s9] sm:$0xff]
      %v1903 = vld [vmem:[%s9 + $0x8] sm:$0xff]
      %v1904 = vld [vmem:[%s9 + $0x10] sm:$0xff]
      %v1905 = vld [vmem:[%s9 + $0x18] sm:$0xff]
      %v1906 = vld [vmem:[%s9 + $0x20] sm:$0xff]
      %v1907 = vld [vmem:[%s9 + $0x28] sm:$0xff]
      %v1908 = vld [vmem:[%s9 + $0x30] sm:$0xff]
      %v1909 = vld [vmem:[%s9 + $0x38] sm:$0xff]
      %v1910 = vld [vmem:[%s9 + $0x40] sm:$0xff]
      %v1911 = vld [vmem:[%s9 + $0x48] sm:$0xff]
      %v1912 = vld [vmem:[%s9 + $0x50] sm:$0xff]
      %v1913 = vld [vmem:[%s9 + $0x58] sm:$0xff]
      %v1914 = vld [vmem:[%s9 + $0x60] sm:$0xff]
      %v1915 = vld [vmem:[%s9 + $0x68] sm:$0xff]
      %v1916 = vld [vmem:[%s9 + $0x70] sm:$0xff]
      %v1917 = vld [vmem:[%s9 + $0x78] sm:$0xff]
      %v1918 = vld [vmem:[%s9 + $0x80] sm:$0xff]
      %v1919 = vld [vmem:[%s9 + $0x88] sm:$0xff]
      %v1920 = vld [vmem:[%s9 + $0x90] sm:$0xff]
      %v1921 = vld [vmem:[%s9 + $0x98] sm:$0xff]
      %v1922 = vld [vmem:[%s9 + $0xa0] sm:$0xff]
      %v1923 = vld [vmem:[%s9 + $0xa8] sm:$0xff]
      %v1924 = vld [vmem:[%s9 + $0xb0] sm:$0xff]
      %v1925 = vld [vmem:[%s9 + $0xb8] sm:$0xff]
      %v1926 = vld [vmem:[%s9 + $0xc0] sm:$0xff]
      %v1927 = vld [vmem:[%s9 + $0xc8] sm:$0xff]
      %v1928 = vld [vmem:[%s9 + $0xd0] sm:$0xff]
      %v1929 = vld [vmem:[%s9 + $0xd8] sm:$0xff]
      %v1930 = vld [vmem:[%s9 + $0xe0] sm:$0xff]
      %v1931 = vld [vmem:[%s9 + $0xe8] sm:$0xff]
      %v1932 = vld [vmem:[%s9 + $0xf0] sm:$0xff]
      %v1933 = vld [vmem:[%s9 + $0xf8] sm:$0xff]
      %v1934 = vld [vmem:[%s9 + $0x100] sm:$0xff]
      %v1935 = vld [vmem:[%s9 + $0x108] sm:$0xff]
      %v1936 = vld [vmem:[%s9 + $0x110] sm:$0xff]
      %v1937 = vld [vmem:[%s9 + $0x118] sm:$0xff]
      %v1938 = vld [vmem:[%s9 + $0x120] sm:$0xff]
      %v1939 = vld [vmem:[%s9 + $0x128] sm:$0xff]
      %v1940 = vld [vmem:[%s9 + $0x130] sm:$0xff]
      %v1941 = vld [vmem:[%s9 + $0x138] sm:$0xff]
      %v1942 = vld [vmem:[%s9 + $0x140] sm:$0xff]
      %v1943 = vld [vmem:[%s9 + $0x148] sm:$0xff]
      %v1944 = vld [vmem:[%s9 + $0x150] sm:$0xff]
      %v1945 = vld [vmem:[%s9 + $0x158] sm:$0xff]
      %v1946 = vld [vmem:[%s9 + $0x160] sm:$0xff]
      %v1947 = vld [vmem:[%s9 + $0x168] sm:$0xff]
      %v1948 = vld [vmem:[%s9 + $0x170] sm:$0xff]
      %v1949 = vld [vmem:[%s9 + $0x178] sm:$0xff]
      %v1950 = vld [vmem:[%s9 + $0x180] sm:$0xff]
      %v1951 = vld [vmem:[%s9 + $0x188] sm:$0xff]
      %v1952 = vld [vmem:[%s9 + $0x190] sm:$0xff]
      %v1953 = vld [vmem:[%s9 + $0x198] sm:$0xff]
      %v1954 = vld [vmem:[%s9 + $0x1a0] sm:$0xff]
      %v1955 = vld [vmem:[%s9 + $0x1a8] sm:$0xff]
      %v1956 = vld [vmem:[%s9 + $0x1b0] sm:$0xff]
      %v1957 = vld [vmem:[%s9 + $0x1b8] sm:$0xff]
      %v1958 = vld [vmem:[%s9 + $0x1c0] sm:$0xff]
      %v1959 = vld [vmem:[%s9 + $0x1c8] sm:$0xff]
      %v1960 = vld [vmem:[%s9 + $0x1d0] sm:$0xff]
      %v1961 = vld [vmem:[%s9 + $0x1d8] sm:$0xff]
      %v1962 = vld [vmem:[%s9 + $0x1e0] sm:$0xff]
      %v1963 = vld [vmem:[%s9 + $0x1e8] sm:$0xff]
      %v1964 = vld [vmem:[%s9 + $0x1f0] sm:$0xff]
      %v1965 = vld [vmem:[%s9 + $0x1f8] sm:$0xff]
      %1966 = vmatprep.subr.mxu0 0.0
      %1967 = vmatpush1.msra.mxu0 %v1902
      %1968 = vmatprep.subr.mxu0 0.0
      %1969 = vmatpush1.msra.mxu0 %v1903
      %1970 = vmatprep.subr.mxu0 0.0
      %1971 = vmatpush1.msra.mxu0 %v1904
      %1972 = vmatprep.subr.mxu0 0.0
      %1973 = vmatpush1.msra.mxu0 %v1905
      %1974 = vmatprep.subr.mxu0 0.0
      %1975 = vmatpush1.msra.mxu0 %v1906
      %1976 = vmatprep.subr.mxu0 0.0
      %1977 = vmatpush1.msra.mxu0 %v1907
      %1978 = vmatprep.subr.mxu0 0.0
      %1979 = vmatpush1.msra.mxu0 %v1908
      %1980 = vmatprep.subr.mxu0 0.0
      %1981 = vmatpush1.msra.mxu0 %v1909
      %1982 = vmatprep.subr.mxu0 0.0
      %1983 = vmatpush1.msra.mxu0 %v1910
      %1984 = vmatprep.subr.mxu0 0.0
      %1985 = vmatpush1.msra.mxu0 %v1911
      %1986 = vmatprep.subr.mxu0 0.0
      %1987 = vmatpush1.msra.mxu0 %v1912
      %1988 = vmatprep.subr.mxu0 0.0
      %1989 = vmatpush1.msra.mxu0 %v1913
      %1990 = vmatprep.subr.mxu0 0.0
      %1991 = vmatpush1.msra.mxu0 %v1914
      %1992 = vmatprep.subr.mxu0 0.0
      %1993 = vmatpush1.msra.mxu0 %v1915
      %1994 = vmatprep.subr.mxu0 0.0
      %1995 = vmatpush1.msra.mxu0 %v1916
      %1996 = vmatprep.subr.mxu0 0.0
      %1997 = vmatpush1.msra.mxu0 %v1917
      %1998 = vmatprep.subr.mxu0 0.0
      %1999 = vmatpush1.msra.mxu0 %v1918
      %2000 = vmatprep.subr.mxu0 0.0
      %2001 = vmatpush1.msra.mxu0 %v1919
      %2002 = vmatprep.subr.mxu0 0.0
      %2003 = vmatpush1.msra.mxu0 %v1920
      %2004 = vmatprep.subr.mxu0 0.0
      %2005 = vmatpush1.msra.mxu0 %v1921
      %2006 = vmatprep.subr.mxu0 0.0
      %2007 = vmatpush1.msra.mxu0 %v1922
      %2008 = vmatprep.subr.mxu0 0.0
      %2009 = vmatpush1.msra.mxu0 %v1923
      %2010 = vmatprep.subr.mxu0 0.0
      %2011 = vmatpush1.msra.mxu0 %v1924
      %2012 = vmatprep.subr.mxu0 0.0
      %2013 = vmatpush1.msra.mxu0 %v1925
      %2014 = vmatprep.subr.mxu0 0.0
      %2015 = vmatpush1.msra.mxu0 %v1926
      %2016 = vmatprep.subr.mxu0 0.0
      %2017 = vmatpush1.msra.mxu0 %v1927
      %2018 = vmatprep.subr.mxu0 0.0
      %2019 = vmatpush1.msra.mxu0 %v1928
      %2020 = vmatprep.subr.mxu0 0.0
      %2021 = vmatpush1.msra.mxu0 %v1929
      %2022 = vmatprep.subr.mxu0 0.0
      %2023 = vmatpush1.msra.mxu0 %v1930
      %2024 = vmatprep.subr.mxu0 0.0
      %2025 = vmatpush1.msra.mxu0 %v1931
      %2026 = vmatprep.subr.mxu0 0.0
      %2027 = vmatpush1.msra.mxu0 %v1932
      %2028 = vmatprep.subr.mxu0 0.0
      %2029 = vmatpush1.msra.mxu0 %v1933
      %2030 = vmatprep.mubr.f32.mxu0 %v1899
      %2031 = vmatmul.mubr.f32.gmra.mrb[0].mxu0 %v1898
      %v2032 = vpop.f32.mrb[0].mxu0
      %v2033 = vadd.f32 0.0, %v2032
      %v2034 = vpop.f32.mrb[0].mxu0
      %2035 = vdwg.mxu0
      %2036 = vmatprep.subr.mxu0 0.0
      %2037 = vmatpush1.msra.mxu0 %v1934
      %2038 = vmatprep.subr.mxu0 0.0
      %2039 = vmatpush1.msra.mxu0 %v1935
      %2040 = vmatprep.subr.mxu0 0.0
      %2041 = vmatpush1.msra.mxu0 %v1936
      %2042 = vmatprep.subr.mxu0 0.0
      %2043 = vmatpush1.msra.mxu0 %v1937
      %2044 = vmatprep.subr.mxu0 0.0
      %2045 = vmatpush1.msra.mxu0 %v1938
      %2046 = vmatprep.subr.mxu0 0.0
      %2047 = vmatpush1.msra.mxu0 %v1939
      %2048 = vmatprep.subr.mxu0 0.0
      %2049 = vmatpush1.msra.mxu0 %v1940
      %2050 = vmatprep.subr.mxu0 0.0
      %2051 = vmatpush1.msra.mxu0 %v1941
      %2052 = vmatprep.subr.mxu0 0.0
      %2053 = vmatpush1.msra.mxu0 %v1942
      %2054 = vmatprep.subr.mxu0 0.0
      %2055 = vmatpush1.msra.mxu0 %v1943
      %2056 = vmatprep.subr.mxu0 0.0
      %2057 = vmatpush1.msra.mxu0 %v1944
      %2058 = vmatprep.subr.mxu0 0.0
      %2059 = vmatpush1.msra.mxu0 %v1945
      %2060 = vmatprep.subr.mxu0 0.0
      %2061 = vmatpush1.msra.mxu0 %v1946
      %2062 = vmatprep.subr.mxu0 0.0
      %2063 = vmatpush1.msra.mxu0 %v1947
      %2064 = vmatprep.subr.mxu0 0.0
      %2065 = vmatpush1.msra.mxu0 %v1948
      %2066 = vmatprep.subr.mxu0 0.0
      %2067 = vmatpush1.msra.mxu0 %v1949
      %2068 = vmatprep.subr.mxu0 0.0
      %2069 = vmatpush1.msra.mxu0 %v1950
      %2070 = vmatprep.subr.mxu0 0.0
      %2071 = vmatpush1.msra.mxu0 %v1951
      %2072 = vmatprep.subr.mxu0 0.0
      %2073 = vmatpush1.msra.mxu0 %v1952
      %2074 = vmatprep.subr.mxu0 0.0
      %2075 = vmatpush1.msra.mxu0 %v1953
      %2076 = vmatprep.subr.mxu0 0.0
      %2077 = vmatpush1.msra.mxu0 %v1954
      %2078 = vmatprep.subr.mxu0 0.0
      %2079 = vmatpush1.msra.mxu0 %v1955
      %2080 = vmatprep.subr.mxu0 0.0
      %2081 = vmatpush1.msra.mxu0 %v1956
      %2082 = vmatprep.subr.mxu0 0.0
      %2083 = vmatpush1.msra.mxu0 %v1957
      %2084 = vmatprep.subr.mxu0 0.0
      %2085 = vmatpush1.msra.mxu0 %v1958
      %2086 = vmatprep.subr.mxu0 0.0
      %2087 = vmatpush1.msra.mxu0 %v1959
      %2088 = vmatprep.subr.mxu0 0.0
      %2089 = vmatpush1.msra.mxu0 %v1960
      %2090 = vmatprep.subr.mxu0 0.0
      %2091 = vmatpush1.msra.mxu0 %v1961
      %2092 = vmatprep.subr.mxu0 0.0
      %2093 = vmatpush1.msra.mxu0 %v1962
      %2094 = vmatprep.subr.mxu0 0.0
      %2095 = vmatpush1.msra.mxu0 %v1963
      %2096 = vmatprep.subr.mxu0 0.0
      %2097 = vmatpush1.msra.mxu0 %v1964
      %2098 = vmatprep.subr.mxu0 0.0
      %2099 = vmatpush1.msra.mxu0 %v1965
      %2100 = vmatprep.mubr.f32.mxu0 %v1901
      %2101 = vmatmul.mubr.f32.gmra.mrb[0].mxu0 %v1900
      %v2102 = vpop.f32.mrb[0].mxu0
      %v2103 = vadd.f32 %v2033, %v2102
      %v2104 = vpop.f32.mrb[0].mxu0
      %2105 = vdwg.mxu0
      %2106 = vst [vmem:[%s357] sm:$0xff] %v2103
      %p2107 = scmp.lt.s32.totalorder %s21, 1
      %s2108 = scalar_select %p2107, %s21, 1
      %s2109 = smul.addr %s2108, 8
      %s2110 = scalar_lea.vmem %s10, %s2109
      // Predicated region
      $region61: #{global_height_conv_forward.1} parent=59 // pred_check
        %p2111 = pneg %p254
      $region62: #{global_height_conv_forward.1} parent=59 // pred_check_branch
        %2113 = sbr.rel (%p2111) target = $region64
      $region63: #{global_height_conv_forward.1} parent=59 // pred_region
        _
      $region64: #{global_height_conv_forward.1} parent=59 // pred_fallthru
        _
    $region60: #{global_height_conv_forward.1} parent=5 // pred_fallthru
      _
    %p2114 = scmp.le.s32.totalorder 2, %s16
    // Predicated region
    $region65: #{global_height_conv_forward.1} parent=5 // pred_check
      %p2115 = pneg %p2114
    $region66: #{global_height_conv_forward.1} parent=5 // pred_check_branch
      %2117 = sbr.rel (%p2115) target = $region68
    $region67: #{global_height_conv_forward.1} parent=5 // pred_region
      %s2118 = ssub.s32 %s16, 2
      // Predicated region
      $region69: #{global_height_conv_forward.1} parent=67 // pred_check
        %p2119 = pneg %p260
      $region70: #{global_height_conv_forward.1} parent=67 // pred_check_branch
        %2121 = sbr.rel (%p2119) target = $region72
      $region71: #{global_height_conv_forward.1} parent=67 // pred_region
        %p2122 = scmp.lt.s32.totalorder %s22, 1
        %s2123 = scalar_select %p2122, %s22, 1
        %s2124 = smul.addr %s2123, 8
        %s2125 = scalar_lea.vmem %s10, %s2124
      $region72: #{global_height_conv_forward.1} parent=67 // pred_fallthru
        _
    $region68: #{global_height_conv_forward.1} parent=5 // pred_fallthru
      _
  $region6: #{global_height_conv_forward.1} parent=0 // loop_footer
    %s20 = sadd.s32 1, %s16
  $region7: #{global_height_conv_forward.1} parent=0 // loop_footer_branch
    %15 = sbr.rel target = $region3
  $region8: #{global_height_conv_forward.1} parent=0 // loop_exit
    _

</llo_original>
